<compile_context>
chip_gen: v6e
topology: v6e:2x2x1
jax: 0.10.0
libtpu: 0.0.40
codegen_flags: <defaults>
</compile_context>

<pallas_src>
import functools

import jax
import jax.numpy as jnp
from jax.experimental import pallas as pl
from jax.experimental.pallas import tpu as pltpu

P = 128            # lane width
SUB = 16           # bf16 sublane packing: pad every fan-out / contraction dim to 16
N_LAYERS = 10


def _round_up(v, m):
    return (v + m - 1) // m * m


def _layer_dims(k):
    return [
        # encoder
        (k, 100), (100, 50), (50, 25), (25, 10), (10, 1),
        # decoder
        (1, 10), (10, 25), (25, 50), (50, 100), (100, k),
    ]


def init_params(key, k):
    """PyTorch nn.Linear-style init; weights stored (in, out) so y = x @ W + b."""
    params = []
    for fin, fout in _layer_dims(k):
        key, kw, kb = jax.random.split(key, 3)
        bound = 1.0 / jnp.sqrt(jnp.float32(fin))
        w = jax.random.uniform(kw, (fin, fout), jnp.float32, -bound, bound)
        b = jax.random.uniform(kb, (fout,), jnp.float32, -bound, bound)
        params.append((w, b))
    return params


def pack_params(params, *, param_dtype=jnp.bfloat16):
    """Pack parameters for the batch-in-lanes kernel.

    Each weight is stored transposed, (fan_out, fan_in): fan_out padded to SUB
    sublanes, fan_in zero-padded to 128 lanes; all blocks concatenated along
    sublanes into ONE (R, 128) array (single parameter DMA).  Biases go into ONE
    (128, 128) f32 array with layer i's bias in column i.  Returns
    (w_packed, b_packed, offs, mrows, kdims):
      offs[i]  = sublane offset of layer i's weight block,
      mrows[i] = padded fan-out (matmul M / output feature rows),
      kdims[i] = contraction width (= previous layer's mrows; padded input rows
                 for layer 0).  Zero padding keeps padded rows exactly 0 end-to-end.
    """
    blocks, offs, mrows, kdims = [], [], [], []
    b_packed = jnp.zeros((P, P), jnp.float32)
    off = 0
    for li, (w, b) in enumerate(params):
        fin, fout = w.shape
        m = _round_up(fout, SUB)
        kc = _round_up(fin, SUB) if li == 0 else mrows[li - 1]
        wt = jnp.zeros((m, P), jnp.float32).at[:fout, :fin].set(w.T)
        blocks.append(wt)
        b_packed = b_packed.at[:fout, li].set(b)
        offs.append(off)
        mrows.append(m)
        kdims.append(kc)
        off += m
    w_packed = jnp.concatenate(blocks, axis=0).astype(param_dtype)   # (480, 128) for k<=16
    return w_packed, b_packed, tuple(offs), tuple(mrows), tuple(kdims)


def f_ae_kernel(xT_ref, w_ref, b_ref, recon_ref, z_ref, *,
                offs, mrows, kdims, param_dtype):
    """Full 10-layer MLP chain for one batch tile, batch along lanes.

    Activations are (feature_pad, TB) so each jnp.dot has M = fan_out_pad (<=112),
    K = fan_in_pad (<=112) and N = TB (the batch), i.e. the 256-wide MXU output
    dimension carries the batch and LHS pushes no longer scale with TB.
    """
    h = xT_ref[...]                                  # (kin, TB) bf16 input tile
    b_all = b_ref[...]                               # (128, 128) f32; layer i in column i
    z_row = None
    for i in range(N_LAYERS):
        m, kc, off = mrows[i], kdims[i], offs[i]
        wt = w_ref[off:off + m, :][:, :kc]           # (m, kc) bf16 transposed weight
        acc = jnp.dot(wt, h.astype(param_dtype),
                      preferred_element_type=jnp.float32)        # (m, TB) f32
        acc = acc + b_all[:m, i:i + 1]               # per-feature-row bias, lane-broadcast
        if i == 4:
            z_row = acc[0:1, :]                      # bottleneck z (row 0), pre-activation
            h = acc                                  # no ReLU on the bottleneck layer
        elif i == 9:
            h = acc                                  # final layer: sigmoid below
        else:
            h = jnp.maximum(acc, 0.0)                # ReLU (f32, VPU)
    recon_ref[...] = jax.nn.sigmoid(h)               # (round_up(k,16), TB) f32
    z_ref[...] = jnp.broadcast_to(z_row, z_ref.shape)   # z replicated over 8 sublanes


@functools.partial(jax.jit, static_argnames=("k", "offs", "mrows", "kdims", "tb"))
def f_ae_forward(x, w_packed, b_packed, *, k, offs, mrows, kdims, tb=1024):
    """x: (B, k) float32 (nn.Flatten on (B, k) is a no-op).
    Returns (final, z): final (B, 2, k//2) sigmoid reconstruction, z (B, 1) bottleneck."""
    assert k <= P, "feature width must fit in 128 lanes"
    # TODO(synk): PyTorch's nn.Unflatten(1, (2, k)) is inconsistent with Linear(..., k)
    # (needs 2*k features); reshape to (B, 2, k//2) is the nearest valid interpretation.
    assert k % 2 == 0, "k must be even for the (B, 2, k//2) unflatten interpretation"
    # TODO(synk): normalize_columns / denormalize_columns / force_columns_to_values and
    # the nonexistent self.force_values in the reference forward are omitted (the spec's
    # forward is not runnable as written); only the encoder/decoder math is implemented.

    B = x.shape[0]
    # Batch tile: as large as possible (amortizes per-step overhead and per-layer MXU
    # operand reloads), but capped at ceil(B/2) rounded to 128 so the "parallel" grid
    # has >= 2 steps whenever B allows it (both v7x TensorCores stay busy).
    half = -(-B // 2)
    tb_eff = max(P, (min(tb, _round_up(half, P)) // P) * P)
    nsteps = -(-B // tb_eff)
    b_pad = nsteps * tb_eff

    kin = kdims[0]                     # round_up(k, 16): padded input-feature rows
    m_out = mrows[-1]                  # round_up(k, 16): reconstruction rows

    # Batch-in-lanes input, streamed as bf16 (the kernel casts to bf16 anyway).
    xT = jnp.zeros((kin, b_pad), jnp.bfloat16).at[:k, :B].set(
        x.astype(jnp.bfloat16).T)

    kernel = functools.partial(f_ae_kernel, offs=offs, mrows=mrows, kdims=kdims,
                               param_dtype=w_packed.dtype)

    flops = 2 * b_pad * sum(m * c for m, c in zip(mrows, kdims))
    bytes_accessed = (xT.size * 2 + w_packed.size * 2 + b_packed.size * 4
                      + (m_out + 8) * b_pad * 4)
    cost = pl.CostEstimate(flops=flops, transcendentals=m_out * b_pad,
                           bytes_accessed=bytes_accessed)

    recon_t, z_t = pl.pallas_call(
        kernel,
        out_shape=(jax.ShapeDtypeStruct((m_out, b_pad), jnp.float32),
                   jax.ShapeDtypeStruct((8, b_pad), jnp.float32)),
        grid_spec=pltpu.PrefetchScalarGridSpec(
            num_scalar_prefetch=0,
            grid=(nsteps,),
            in_specs=[
                pl.BlockSpec((kin, tb_eff), lambda i: (0, i)),      # batch stream (bf16)
                pl.BlockSpec(w_packed.shape, lambda i: (0, 0)),     # resident weights
                pl.BlockSpec(b_packed.shape, lambda i: (0, 0)),     # resident biases
            ],
            out_specs=[
                pl.BlockSpec((m_out, tb_eff), lambda i: (0, i)),    # narrow f32 recon
                pl.BlockSpec((8, tb_eff), lambda i: (0, i)),        # f32 bottleneck z
            ],
        ),
        compiler_params=pltpu.CompilerParams(
            dimension_semantics=("parallel",)),     # shards the batch across v7x's 2 TCs
        cost_estimate=cost,
    )(xT, w_packed, b_packed)

    recon = recon_t.T[:B, :k]          # tiny post-pass: ~(k + 8) f32 lanes per row
    z = z_t[0, :B][:, None]
    final = recon.reshape(B, 2, k // 2)
    return final, z


if __name__ == "__main__":
    k = 16
    B = 512            # -> two 256-column batch tiles: exercises the parallel grid

    key = jax.random.PRNGKey(0)
    key_x, key_p = jax.random.split(key)
    x = jax.random.uniform(key_x, (B, k), jnp.float32)
    params = init_params(key_p, k)

    w_packed, b_packed, offs, mrows, kdims = pack_params(params, param_dtype=jnp.bfloat16)
    final, z = f_ae_forward(x, w_packed, b_packed, k=k, offs=offs,
                            mrows=mrows, kdims=kdims)
    jax.block_until_ready((final, z))

    # Pure-JAX reference emulating the kernel's bf16 weight/activation casts
    # (f32 accumulation).  A pure-f32 reference would differ by ~1e-2 on logits.
    def bf(v):
        return v.astype(jnp.bfloat16).astype(jnp.float32)

    h = x
    z_ref = None
    for i, (w, b) in enumerate(params):
        h = jnp.dot(bf(h), bf(w), precision=jax.lax.Precision.HIGHEST) + b
        if i == 4:
            z_ref = h                  # bottleneck taken pre-activation, as in the kernel
        elif i != 9:
            h = jax.nn.relu(h)
    final_ref = jax.nn.sigmoid(h).reshape(B, 2, k // 2)

    assert final.shape == (B, 2, k // 2) and z.shape == (B, 1)
    assert jnp.allclose(z, z_ref, atol=2e-3), "z mismatch"
    assert jnp.allclose(final, final_ref, atol=2e-3), "final mismatch"
    print("KERNEL_OK")
</pallas_src>

<mosaic_0001>
module attributes {stable_mosaic.version = 11 : i64} {
  func.func @f_ae_kernel(%arg0: i32, %arg1: memref<16x256xbf16, #tpu.memory_space<vmem>>, %arg2: memref<480x128xbf16, #tpu.memory_space<vmem>>, %arg3: memref<128x128xf32, #tpu.memory_space<vmem>>, %arg4: memref<16x256xf32, #tpu.memory_space<vmem>>, %arg5: memref<8x256xf32, #tpu.memory_space<vmem>>) attributes {dimension_semantics = [#tpu.dimension_semantics<parallel>], iteration_bounds = array<i64: 2>, scalar_prefetch = 0 : i64, scratch_operands = 0 : i64, tpu.core_type = #tpu.core_type<tc>, window_params = [{transform_indices = @transform_0, window_bounds = array<i64: 16, 256>}, {pipeline_mode = #tpu.pipeline_mode<synchronous>, transform_indices = @transform_1, window_bounds = array<i64: 480, 128>}, {pipeline_mode = #tpu.pipeline_mode<synchronous>, transform_indices = @transform_2, window_bounds = array<i64: 128, 128>}, {transform_indices = @transform_3, window_bounds = array<i64: 16, 256>}, {transform_indices = @transform_4, window_bounds = array<i64: 8, 256>}]} {
    %c0 = arith.constant 0 : index
    %c0_0 = arith.constant 0 : index
    %0 = vector.load %arg1[%c0, %c0_0] : memref<16x256xbf16, #tpu.memory_space<vmem>>, vector<16x256xbf16>
    %c0_1 = arith.constant 0 : index
    %c0_2 = arith.constant 0 : index
    %1 = vector.load %arg3[%c0_1, %c0_2] : memref<128x128xf32, #tpu.memory_space<vmem>>, vector<128x128xf32>
    %c0_3 = arith.constant 0 : index
    %c0_4 = arith.constant 0 : index
    %2 = vector.load %arg2[%c0_3, %c0_4] : memref<480x128xbf16, #tpu.memory_space<vmem>>, vector<112x128xbf16>
    %3 = vector.extract_strided_slice %2 {offsets = [0, 0], sizes = [112, 16], strides = [1, 1]} : vector<112x128xbf16> to vector<112x16xbf16>
    %cst = arith.constant dense<0.000000e+00> : vector<112x256xf32>
    %4 = tpu.matmul %3, %0, %cst {dimension_numbers = #tpu.dot_dimension_numbers<[1], [0], [0], [1], [0, 0, 1, 1], [], []>} : vector<112x16xbf16>, vector<16x256xbf16>, vector<112x256xf32> -> vector<112x256xf32>
    %5 = vector.extract_strided_slice %1 {offsets = [0, 0], sizes = [112, 1], strides = [1, 1]} : vector<128x128xf32> to vector<112x1xf32>
    %6 = vector.broadcast %5 : vector<112x1xf32> to vector<112x256xf32>
    %7 = arith.addf %4, %6 : vector<112x256xf32>
    %cst_5 = arith.constant 0.000000e+00 : f32
    %8 = vector.broadcast %cst_5 : f32 to vector<112x256xf32>
    %9 = arith.maximumf %7, %8 : vector<112x256xf32>
    %c112 = arith.constant 112 : index
    %c0_6 = arith.constant 0 : index
    %10 = vector.load %arg2[%c112, %c0_6] : memref<480x128xbf16, #tpu.memory_space<vmem>>, vector<64x128xbf16>
    %11 = vector.extract_strided_slice %10 {offsets = [0, 0], sizes = [64, 112], strides = [1, 1]} : vector<64x128xbf16> to vector<64x112xbf16>
    %12 = arith.truncf %9 : vector<112x256xf32> to vector<112x256xbf16>
    %cst_7 = arith.constant dense<0.000000e+00> : vector<64x256xf32>
    %13 = tpu.matmul %11, %12, %cst_7 {dimension_numbers = #tpu.dot_dimension_numbers<[1], [0], [0], [1], [0, 0, 1, 1], [], []>} : vector<64x112xbf16>, vector<112x256xbf16>, vector<64x256xf32> -> vector<64x256xf32>
    %14 = vector.extract_strided_slice %1 {offsets = [0, 1], sizes = [64, 1], strides = [1, 1]} : vector<128x128xf32> to vector<64x1xf32>
    %15 = vector.broadcast %14 : vector<64x1xf32> to vector<64x256xf32>
    %16 = arith.addf %13, %15 : vector<64x256xf32>
    %cst_8 = arith.constant 0.000000e+00 : f32
    %17 = vector.broadcast %cst_8 : f32 to vector<64x256xf32>
    %18 = arith.maximumf %16, %17 : vector<64x256xf32>
    %c176 = arith.constant 176 : index
    %c0_9 = arith.constant 0 : index
    %19 = vector.load %arg2[%c176, %c0_9] : memref<480x128xbf16, #tpu.memory_space<vmem>>, vector<32x128xbf16>
    %20 = vector.extract_strided_slice %19 {offsets = [0, 0], sizes = [32, 64], strides = [1, 1]} : vector<32x128xbf16> to vector<32x64xbf16>
    %21 = arith.truncf %18 : vector<64x256xf32> to vector<64x256xbf16>
    %cst_10 = arith.constant dense<0.000000e+00> : vector<32x256xf32>
    %22 = tpu.matmul %20, %21, %cst_10 {dimension_numbers = #tpu.dot_dimension_numbers<[1], [0], [0], [1], [0, 0, 1, 1], [], []>} : vector<32x64xbf16>, vector<64x256xbf16>, vector<32x256xf32> -> vector<32x256xf32>
    %23 = vector.extract_strided_slice %1 {offsets = [0, 2], sizes = [32, 1], strides = [1, 1]} : vector<128x128xf32> to vector<32x1xf32>
    %24 = vector.broadcast %23 : vector<32x1xf32> to vector<32x256xf32>
    %25 = arith.addf %22, %24 : vector<32x256xf32>
    %cst_11 = arith.constant 0.000000e+00 : f32
    %26 = vector.broadcast %cst_11 : f32 to vector<32x256xf32>
    %27 = arith.maximumf %25, %26 : vector<32x256xf32>
    %c208 = arith.constant 208 : index
    %c0_12 = arith.constant 0 : index
    %28 = vector.load %arg2[%c208, %c0_12] : memref<480x128xbf16, #tpu.memory_space<vmem>>, vector<16x128xbf16>
    %29 = vector.extract_strided_slice %28 {offsets = [0, 0], sizes = [16, 32], strides = [1, 1]} : vector<16x128xbf16> to vector<16x32xbf16>
    %30 = arith.truncf %27 : vector<32x256xf32> to vector<32x256xbf16>
    %cst_13 = arith.constant dense<0.000000e+00> : vector<16x256xf32>
    %31 = tpu.matmul %29, %30, %cst_13 {dimension_numbers = #tpu.dot_dimension_numbers<[1], [0], [0], [1], [0, 0, 1, 1], [], []>} : vector<16x32xbf16>, vector<32x256xbf16>, vector<16x256xf32> -> vector<16x256xf32>
    %32 = vector.extract_strided_slice %1 {offsets = [0, 3], sizes = [16, 1], strides = [1, 1]} : vector<128x128xf32> to vector<16x1xf32>
    %33 = vector.broadcast %32 : vector<16x1xf32> to vector<16x256xf32>
    %34 = arith.addf %31, %33 : vector<16x256xf32>
    %cst_14 = arith.constant 0.000000e+00 : f32
    %35 = vector.broadcast %cst_14 : f32 to vector<16x256xf32>
    %36 = arith.maximumf %34, %35 : vector<16x256xf32>
    %c224 = arith.constant 224 : index
    %c0_15 = arith.constant 0 : index
    %37 = vector.load %arg2[%c224, %c0_15] : memref<480x128xbf16, #tpu.memory_space<vmem>>, vector<16x128xbf16>
    %38 = vector.extract_strided_slice %37 {offsets = [0, 0], sizes = [16, 16], strides = [1, 1]} : vector<16x128xbf16> to vector<16x16xbf16>
    %39 = arith.truncf %36 : vector<16x256xf32> to vector<16x256xbf16>
    %cst_16 = arith.constant dense<0.000000e+00> : vector<16x256xf32>
    %40 = tpu.matmul %38, %39, %cst_16 {dimension_numbers = #tpu.dot_dimension_numbers<[1], [0], [0], [1], [0, 0, 1, 1], [], []>} : vector<16x16xbf16>, vector<16x256xbf16>, vector<16x256xf32> -> vector<16x256xf32>
    %41 = vector.extract_strided_slice %1 {offsets = [0, 4], sizes = [16, 1], strides = [1, 1]} : vector<128x128xf32> to vector<16x1xf32>
    %42 = vector.broadcast %41 : vector<16x1xf32> to vector<16x256xf32>
    %43 = arith.addf %40, %42 : vector<16x256xf32>
    %44 = vector.extract_strided_slice %43 {offsets = [0, 0], sizes = [1, 256], strides = [1, 1]} : vector<16x256xf32> to vector<1x256xf32>
    %c240 = arith.constant 240 : index
    %c0_17 = arith.constant 0 : index
    %45 = vector.load %arg2[%c240, %c0_17] : memref<480x128xbf16, #tpu.memory_space<vmem>>, vector<16x128xbf16>
    %46 = vector.extract_strided_slice %45 {offsets = [0, 0], sizes = [16, 16], strides = [1, 1]} : vector<16x128xbf16> to vector<16x16xbf16>
    %47 = arith.truncf %43 : vector<16x256xf32> to vector<16x256xbf16>
    %cst_18 = arith.constant dense<0.000000e+00> : vector<16x256xf32>
    %48 = tpu.matmul %46, %47, %cst_18 {dimension_numbers = #tpu.dot_dimension_numbers<[1], [0], [0], [1], [0, 0, 1, 1], [], []>} : vector<16x16xbf16>, vector<16x256xbf16>, vector<16x256xf32> -> vector<16x256xf32>
    %49 = vector.extract_strided_slice %1 {offsets = [0, 5], sizes = [16, 1], strides = [1, 1]} : vector<128x128xf32> to vector<16x1xf32>
    %50 = vector.broadcast %49 : vector<16x1xf32> to vector<16x256xf32>
    %51 = arith.addf %48, %50 : vector<16x256xf32>
    %cst_19 = arith.constant 0.000000e+00 : f32
    %52 = vector.broadcast %cst_19 : f32 to vector<16x256xf32>
    %53 = arith.maximumf %51, %52 : vector<16x256xf32>
    %c256 = arith.constant 256 : index
    %c0_20 = arith.constant 0 : index
    %54 = vector.load %arg2[%c256, %c0_20] : memref<480x128xbf16, #tpu.memory_space<vmem>>, vector<32x128xbf16>
    %55 = vector.extract_strided_slice %54 {offsets = [0, 0], sizes = [32, 16], strides = [1, 1]} : vector<32x128xbf16> to vector<32x16xbf16>
    %56 = arith.truncf %53 : vector<16x256xf32> to vector<16x256xbf16>
    %cst_21 = arith.constant dense<0.000000e+00> : vector<32x256xf32>
    %57 = tpu.matmul %55, %56, %cst_21 {dimension_numbers = #tpu.dot_dimension_numbers<[1], [0], [0], [1], [0, 0, 1, 1], [], []>} : vector<32x16xbf16>, vector<16x256xbf16>, vector<32x256xf32> -> vector<32x256xf32>
    %58 = vector.extract_strided_slice %1 {offsets = [0, 6], sizes = [32, 1], strides = [1, 1]} : vector<128x128xf32> to vector<32x1xf32>
    %59 = vector.broadcast %58 : vector<32x1xf32> to vector<32x256xf32>
    %60 = arith.addf %57, %59 : vector<32x256xf32>
    %cst_22 = arith.constant 0.000000e+00 : f32
    %61 = vector.broadcast %cst_22 : f32 to vector<32x256xf32>
    %62 = arith.maximumf %60, %61 : vector<32x256xf32>
    %c288 = arith.constant 288 : index
    %c0_23 = arith.constant 0 : index
    %63 = vector.load %arg2[%c288, %c0_23] : memref<480x128xbf16, #tpu.memory_space<vmem>>, vector<64x128xbf16>
    %64 = vector.extract_strided_slice %63 {offsets = [0, 0], sizes = [64, 32], strides = [1, 1]} : vector<64x128xbf16> to vector<64x32xbf16>
    %65 = arith.truncf %62 : vector<32x256xf32> to vector<32x256xbf16>
    %cst_24 = arith.constant dense<0.000000e+00> : vector<64x256xf32>
    %66 = tpu.matmul %64, %65, %cst_24 {dimension_numbers = #tpu.dot_dimension_numbers<[1], [0], [0], [1], [0, 0, 1, 1], [], []>} : vector<64x32xbf16>, vector<32x256xbf16>, vector<64x256xf32> -> vector<64x256xf32>
    %67 = vector.extract_strided_slice %1 {offsets = [0, 7], sizes = [64, 1], strides = [1, 1]} : vector<128x128xf32> to vector<64x1xf32>
    %68 = vector.broadcast %67 : vector<64x1xf32> to vector<64x256xf32>
    %69 = arith.addf %66, %68 : vector<64x256xf32>
    %cst_25 = arith.constant 0.000000e+00 : f32
    %70 = vector.broadcast %cst_25 : f32 to vector<64x256xf32>
    %71 = arith.maximumf %69, %70 : vector<64x256xf32>
    %c352 = arith.constant 352 : index
    %c0_26 = arith.constant 0 : index
    %72 = vector.load %arg2[%c352, %c0_26] : memref<480x128xbf16, #tpu.memory_space<vmem>>, vector<112x128xbf16>
    %73 = vector.extract_strided_slice %72 {offsets = [0, 0], sizes = [112, 64], strides = [1, 1]} : vector<112x128xbf16> to vector<112x64xbf16>
    %74 = arith.truncf %71 : vector<64x256xf32> to vector<64x256xbf16>
    %cst_27 = arith.constant dense<0.000000e+00> : vector<112x256xf32>
    %75 = tpu.matmul %73, %74, %cst_27 {dimension_numbers = #tpu.dot_dimension_numbers<[1], [0], [0], [1], [0, 0, 1, 1], [], []>} : vector<112x64xbf16>, vector<64x256xbf16>, vector<112x256xf32> -> vector<112x256xf32>
    %76 = vector.extract_strided_slice %1 {offsets = [0, 8], sizes = [112, 1], strides = [1, 1]} : vector<128x128xf32> to vector<112x1xf32>
    %77 = vector.broadcast %76 : vector<112x1xf32> to vector<112x256xf32>
    %78 = arith.addf %75, %77 : vector<112x256xf32>
    %cst_28 = arith.constant 0.000000e+00 : f32
    %79 = vector.broadcast %cst_28 : f32 to vector<112x256xf32>
    %80 = arith.maximumf %78, %79 : vector<112x256xf32>
    %c464 = arith.constant 464 : index
    %c0_29 = arith.constant 0 : index
    %81 = vector.load %arg2[%c464, %c0_29] : memref<480x128xbf16, #tpu.memory_space<vmem>>, vector<16x128xbf16>
    %82 = vector.extract_strided_slice %81 {offsets = [0, 0], sizes = [16, 112], strides = [1, 1]} : vector<16x128xbf16> to vector<16x112xbf16>
    %83 = arith.truncf %80 : vector<112x256xf32> to vector<112x256xbf16>
    %cst_30 = arith.constant dense<0.000000e+00> : vector<16x256xf32>
    %84 = tpu.matmul %82, %83, %cst_30 {dimension_numbers = #tpu.dot_dimension_numbers<[1], [0], [0], [1], [0, 0, 1, 1], [], []>} : vector<16x112xbf16>, vector<112x256xbf16>, vector<16x256xf32> -> vector<16x256xf32>
    %85 = vector.extract_strided_slice %1 {offsets = [0, 9], sizes = [16, 1], strides = [1, 1]} : vector<128x128xf32> to vector<16x1xf32>
    %86 = vector.broadcast %85 : vector<16x1xf32> to vector<16x256xf32>
    %87 = arith.addf %84, %86 : vector<16x256xf32>
    %88 = arith.negf %87 : vector<16x256xf32>
    %89 = math.exp %88 : vector<16x256xf32>
    %cst_31 = arith.constant 1.000000e+00 : f32
    %90 = vector.broadcast %cst_31 : f32 to vector<16x256xf32>
    %91 = arith.addf %90, %89 : vector<16x256xf32>
    %92 = arith.divf %90, %91 : vector<16x256xf32>
    %c0_32 = arith.constant 0 : index
    %c0_33 = arith.constant 0 : index
    %93 = vector.load %arg4[%c0_32, %c0_33] : memref<16x256xf32, #tpu.memory_space<vmem>>, vector<16x256xf32>
    tpu.vector_store %arg4[%c0_32, %c0_33], %92 {strides = array<i32>} : memref<16x256xf32, #tpu.memory_space<vmem>>, vector<16x256xf32>,
    %94 = vector.shape_cast %44 : vector<1x256xf32> to vector<1x256xf32>
    %95 = vector.broadcast %94 : vector<1x256xf32> to vector<8x256xf32>
    %c0_34 = arith.constant 0 : index
    %c0_35 = arith.constant 0 : index
    %96 = vector.load %arg5[%c0_34, %c0_35] : memref<8x256xf32, #tpu.memory_space<vmem>>, vector<8x256xf32>
    tpu.vector_store %arg5[%c0_34, %c0_35], %95 {strides = array<i32>} : memref<8x256xf32, #tpu.memory_space<vmem>>, vector<8x256xf32>,
    return
  }
  func.func @transform_0(%arg0: i32) -> (i32, i32) {
    %c0_i32 = arith.constant 0 : i32
    %c0_i32_0 = arith.constant 0 : i32
    return %c0_i32, %arg0 : i32, i32
  }
  func.func @transform_1(%arg0: i32) -> (i32, i32) {
    %c0_i32 = arith.constant 0 : i32
    %c0_i32_0 = arith.constant 0 : i32
    %c0_i32_1 = arith.constant 0 : i32
    return %c0_i32, %c0_i32_0 : i32, i32
  }
  func.func @transform_2(%arg0: i32) -> (i32, i32) {
    %c0_i32 = arith.constant 0 : i32
    %c0_i32_0 = arith.constant 0 : i32
    %c0_i32_1 = arith.constant 0 : i32
    return %c0_i32, %c0_i32_0 : i32, i32
  }
  func.func @transform_3(%arg0: i32) -> (i32, i32) {
    %c0_i32 = arith.constant 0 : i32
    %c0_i32_0 = arith.constant 0 : i32
    return %c0_i32, %arg0 : i32, i32
  }
  func.func @transform_4(%arg0: i32) -> (i32, i32) {
    %c0_i32 = arith.constant 0 : i32
    %c0_i32_0 = arith.constant 0 : i32
    return %c0_i32, %arg0 : i32, i32
  }
}

</mosaic_0001>

<llo_original>
// kernel: f_ae_forward.1
$region0: #{f_ae_forward.1}
  #allocation0 [shape = 'u32[]', space=smem, size = 0x4, offset = 0x4, fixed_abs, tag = 'smem constant byte address 0x4 - core index']
  #allocation1 [shape = 'u32[144,128]{1,0:T(1,128)}', space=vmem, size = 0x12000, scoped, tag = 'internal scratch']
  %s0 = inlined_call_operand.vmem [shape: bf16[16,512], index: 0, kind: input, shape index: {}]
  %s1 = inlined_call_operand.hbm [shape: bf16[480,128], index: 1, kind: input, shape index: {}]
  %s2 = inlined_call_operand.hbm [shape: f32[128,128], index: 2, kind: input, shape index: {}]
  %s3 = inlined_call_operand.hbm [shape: f32[16,512], index: 3, kind: output, shape index: {0}]
  %s4 = inlined_call_operand.vmem [shape: f32[8,512], index: 4, kind: output, shape index: {1}]
  %5 = xla_tuple %s3, %s4
  %s6 = sld [smem:[#allocation0]]
  $region99: #{f_ae_forward.1} parent=0
    _
  %s8 = ssub.s32 1, %s6
  %s9 = scalar_select 0, %s8, %s6
  $region1: #{f_ae_forward.1} parent=0
    #allocation2 [shape = 'u8[16384]{0}', space=vmem, size = 0x4000, scoped, tag = 'input window, operand 0']
    #allocation3 [shape = 'u8[122880]{0}', space=vmem, size = 0x1e000, scoped, tag = 'input window, operand 1, single buffered']
    #allocation4 [shape = 's32[2]{0}', space=sflag, size = 0x8, scoped, tag = 'scoped memory for f_ae_forward.1']
    #allocation5 [shape = 's32[2]{0}', space=sflag, size = 0x8, scoped, tag = 'scoped memory for f_ae_forward.1']
    #allocation6 [shape = 'u8[65536]{0}', space=vmem, size = 0x10000, scoped, tag = 'input window, operand 2, single buffered']
    #allocation7 [shape = 's32[1]{0}', space=sflag, size = 0x4, scoped, tag = 'scoped memory for f_ae_forward.1']
    #allocation8 [shape = 'u8[32768]{0}', space=vmem, size = 0x8000, scoped, tag = 'output window, operand 0']
    %10 = vsyncpa [#allocation4], 0
    %11 = vsyncpa [#allocation7], 0
    %12 = vsyncpa [#allocation5], 0
    %s13 = scalar_lea.sflag [#allocation5], 1
    %14 = vsyncpa %s13, 0
    loop: start=0, step=1, limit=4
    $region2: #{f_ae_forward.1} parent=1 // loop_pre_header
      _
    $region3: #{f_ae_forward.1} parent=1 // loop_header
      %s16 = sphi 0, %s20
      %p17 = scmp.ge.s32.totalorder %s16, 4
      %s26 = sphi 0, %s28
      %s29 = sphi 0, %s26
      %s30 = sphi 0, %s29
      %s46 = sphi 0, %s30
      %s50 = sphi 0, %s50
      %s52 = sphi 0, %s50
      %s53 = sphi 0, %s52
      %s67 = sphi 0, %s53
      %s71 = sphi 0, %s71
      %s73 = sphi 0, %s71
      %s74 = sphi 0, %s73
      %s88 = sphi 0, %s74
      %s94 = sphi 0, %s96
      %s97 = sphi 0, %s94
      %s98 = sphi 0, %s97
      %s114 = sphi 0, %s98
      %s120 = sphi 0, %s122
      %s123 = sphi 0, %s120
      %s124 = sphi 0, %s123
      %s140 = sphi 0, %s124
    $region4: #{f_ae_forward.1} parent=1 // loop_header_branch
      %19 = sbr.rel (%p17) target = $region8
    $region5: #{f_ae_forward.1} parent=1 // loop_body
      %s21 = ssub.s32 %s16, 1
      %s22 = ssub.s32 %s16, 2
      %s23 = sadd.s32 %s16, 1
      %s24 = ssub.s32 %s16, %s23
      %p25 = scmp.eq.s32.totalorder %s24, 0
      %s27 = sadd.s32 %s26, 1
      %s28 = scalar_select %p25, %s26, %s27
      %p31 = pneg %p25
      %p32 = scmp.eq.s32.totalorder %s16, 1
      %p33 = por %p31, %p32
      %p34 = scmp.ne.s32.totalorder %s26, %s29
      %p35 = scmp.eq.s32.totalorder %s16, 0
      %p36 = por %p34, %p35
      %p37 = scmp.ne.s32.totalorder %s26, %s29
      %p38 = scmp.eq.s32.totalorder %s21, 1
      %p39 = por %p37, %p38
      %p40 = scmp.ne.s32.totalorder %s29, %s30
      %p41 = scmp.eq.s32.totalorder %s21, 0
      %p42 = por %p40, %p41
      %p43 = scmp.ne.s32.totalorder %s29, %s30
      %p44 = scmp.eq.s32.totalorder %s22, 1
      %p45 = por %p43, %p44
      %p47 = scmp.ne.s32.totalorder %s30, %s46
      %p48 = scmp.eq.s32.totalorder %s22, 0
      %p49 = por %p47, %p48
      %s51 = sadd.s32 %s50, 1
      %p54 = scmp.eq.s32.totalorder %s16, 1
      %p55 = scmp.ne.s32.totalorder %s50, %s52
      %p56 = scmp.eq.s32.totalorder %s16, 0
      %p57 = por %p55, %p56
      %p58 = scmp.ne.s32.totalorder %s50, %s52
      %p59 = scmp.eq.s32.totalorder %s21, 1
      %p60 = por %p58, %p59
      %p61 = scmp.ne.s32.totalorder %s52, %s53
      %p62 = scmp.eq.s32.totalorder %s21, 0
      %p63 = por %p61, %p62
      %p64 = scmp.ne.s32.totalorder %s52, %s53
      %p65 = scmp.eq.s32.totalorder %s22, 1
      %p66 = por %p64, %p65
      %p68 = scmp.ne.s32.totalorder %s53, %s67
      %p69 = scmp.eq.s32.totalorder %s22, 0
      %p70 = por %p68, %p69
      %s72 = sadd.s32 %s71, 1
      %p75 = scmp.eq.s32.totalorder %s16, 1
      %p76 = scmp.ne.s32.totalorder %s71, %s73
      %p77 = scmp.eq.s32.totalorder %s16, 0
      %p78 = por %p76, %p77
      %p79 = scmp.ne.s32.totalorder %s71, %s73
      %p80 = scmp.eq.s32.totalorder %s21, 1
      %p81 = por %p79, %p80
      %p82 = scmp.ne.s32.totalorder %s73, %s74
      %p83 = scmp.eq.s32.totalorder %s21, 0
      %p84 = por %p82, %p83
      %p85 = scmp.ne.s32.totalorder %s73, %s74
      %p86 = scmp.eq.s32.totalorder %s22, 1
      %p87 = por %p85, %p86
      %p89 = scmp.ne.s32.totalorder %s74, %s88
      %p90 = scmp.eq.s32.totalorder %s22, 0
      %p91 = por %p89, %p90
      %s92 = ssub.s32 %s16, %s23
      %p93 = scmp.eq.s32.totalorder %s92, 0
      %s95 = sadd.s32 %s94, 1
      %s96 = scalar_select %p93, %s94, %s95
      %p99 = pneg %p93
      %p100 = scmp.eq.s32.totalorder %s16, 1
      %p101 = por %p99, %p100
      %p102 = scmp.ne.s32.totalorder %s94, %s97
      %p103 = scmp.eq.s32.totalorder %s16, 0
      %p104 = por %p102, %p103
      %p105 = scmp.ne.s32.totalorder %s94, %s97
      %p106 = scmp.eq.s32.totalorder %s21, 1
      %p107 = por %p105, %p106
      %p108 = scmp.ne.s32.totalorder %s97, %s98
      %p109 = scmp.eq.s32.totalorder %s21, 0
      %p110 = por %p108, %p109
      %p111 = scmp.ne.s32.totalorder %s97, %s98
      %p112 = scmp.eq.s32.totalorder %s22, 1
      %p113 = por %p111, %p112
      %p115 = scmp.ne.s32.totalorder %s98, %s114
      %p116 = scmp.eq.s32.totalorder %s22, 0
      %p117 = por %p115, %p116
      %s118 = ssub.s32 %s16, %s23
      %p119 = scmp.eq.s32.totalorder %s118, 0
      %s121 = sadd.s32 %s120, 1
      %s122 = scalar_select %p119, %s120, %s121
      %p125 = pneg %p119
      %p126 = scmp.eq.s32.totalorder %s16, 1
      %p127 = por %p125, %p126
      %p128 = scmp.ne.s32.totalorder %s120, %s123
      %p129 = scmp.eq.s32.totalorder %s16, 0
      %p130 = por %p128, %p129
      %p131 = scmp.ne.s32.totalorder %s120, %s123
      %p132 = scmp.eq.s32.totalorder %s21, 1
      %p133 = por %p131, %p132
      %p134 = scmp.ne.s32.totalorder %s123, %s124
      %p135 = scmp.eq.s32.totalorder %s21, 0
      %p136 = por %p134, %p135
      %p137 = scmp.ne.s32.totalorder %s123, %s124
      %p138 = scmp.eq.s32.totalorder %s22, 1
      %p139 = por %p137, %p138
      %p141 = scmp.ne.s32.totalorder %s124, %s140
      %p142 = scmp.eq.s32.totalorder %s22, 0
      %p143 = por %p141, %p142
      %p144 = scmp.le.s32.totalorder 1, %s16
      %p145 = scmp.lt.s32.totalorder %s16, 3
      %p146 = pnand %p144, %p145
      %p147 = pneg %p146
      // Predicated region
      $region9: #{f_ae_forward.1} parent=5 // pred_check
        _
      $region10: #{f_ae_forward.1} parent=5 // pred_check_branch
        %149 = sbr.rel (%p146) target = $region12
      $region11: #{f_ae_forward.1} parent=5 // pred_region
        %s150 = ssub.s32 %s16, 1
        // Predicated region
        $region13: #{f_ae_forward.1} parent=11 // pred_check
          %p151 = pneg %p63
        $region14: #{f_ae_forward.1} parent=11 // pred_check_branch
          %153 = sbr.rel (%p151) target = $region16
        $region15: #{f_ae_forward.1} parent=11 // pred_region
          %s155 = ssub.s32 3840, 3840
          %156 = vsyncadd [#allocation4], %s155
          %s157 = sshll.u32 [#allocation3], 4
          %s158 = int_to_ptr.vmem [resolvable:$true] %s157
          %163 = dma.hbm_to_vmem [thread:$0]  %s1, 3840, %s158, [#allocation4], 64, 64, 4
        $region16: #{f_ae_forward.1} parent=11 // pred_fallthru
          _
        // Predicated region
        $region17: #{f_ae_forward.1} parent=11 // pred_check
          %p164 = pneg %p84
        $region18: #{f_ae_forward.1} parent=11 // pred_check_branch
          %166 = sbr.rel (%p164) target = $region20
        $region19: #{f_ae_forward.1} parent=11 // pred_region
          %s168 = ssub.s32 2048, 2048
          %169 = vsyncadd [#allocation7], %s168
          %s170 = sshll.u32 [#allocation6], 4
          %s171 = int_to_ptr.vmem [resolvable:$true] %s170
          %176 = dma.hbm_to_vmem [thread:$0]  %s2, 2048, %s171, [#allocation7], 128, 128, 8
        $region20: #{f_ae_forward.1} parent=11 // pred_fallthru
          _
      $region12: #{f_ae_forward.1} parent=5 // pred_fallthru
        _
      %p177 = scmp.lt.s32.totalorder %s16, 2
      // Predicated region
      $region21: #{f_ae_forward.1} parent=5 // pred_check
        %p178 = pneg %p177
      $region22: #{f_ae_forward.1} parent=5 // pred_check_branch
        %180 = sbr.rel (%p178) target = $region24
      $region23: #{f_ae_forward.1} parent=5 // pred_region
        // Predicated region
        $region25: #{f_ae_forward.1} parent=23 // pred_check
          %p181 = pneg %p36
        $region26: #{f_ae_forward.1} parent=23 // pred_check_branch
          %183 = sbr.rel (%p181) target = $region28
        $region27: #{f_ae_forward.1} parent=23 // pred_region
          %s184 = sand.u32 %s26, 1
          %s185 = sand.u32 %s26, 1
          %s186 = smul.addr %s185, 16
          %s187 = scalar_lea.vmem [#allocation2], %s186
          %s188 = smul.u32 2, %s16
          %s189 = smul.addr %s188, 4
          %s190 = scalar_lea.vmem %s0, %s189
          // Predicated region
          $region29: #{f_ae_forward.1} parent=27 // pred_check
            _
          $region30: #{f_ae_forward.1} parent=27 // pred_check_branch
            %192 = sbr.rel (0) target = $region32
          $region31: #{f_ae_forward.1} parent=27 // pred_region
            // Predicated region
            $region33: #{f_ae_forward.1} parent=31 // pred_check
              _
            $region34: #{f_ae_forward.1} parent=31 // pred_check_branch
              %194 = sbr.rel (0) target = $region36
            $region35: #{f_ae_forward.1} parent=31 // pred_region
              // Predicated region
              $region48: #{f_ae_forward.1} parent=35 // pred_check
                _
              $region49: #{f_ae_forward.1} parent=35 // pred_check_branch
                %212 = sbr.rel (0) target = $region51
              $region50: #{f_ae_forward.1} parent=35 // pred_region
                loop: start=0, step=1, limit=1
                $region52: #{f_ae_forward.1} parent=50 // loop_pre_header
                  _
                $region53: #{f_ae_forward.1} parent=50 // loop_header
                  %s214 = sphi 0, %s218
                  %p215 = scmp.ge.s32.totalorder %s214, 1
                  %s219 = sphi %s190, %s190
                  %s220 = sphi %s187, %s187
                $region54: #{f_ae_forward.1} parent=50 // loop_header_branch
                  %217 = sbr.rel (%p215) target = $region58
                $region55: #{f_ae_forward.1} parent=50 // loop_body
                  %v221 = vld [vmem:[%s219] sm:$0xff]
                  %222 = vst [vmem:[%s220] sm:$0xff] %v221
                  %v223 = vld [vmem:[%s219 + $0x10] sm:$0xff]
                  %224 = vst [vmem:[%s220 + $0x8] sm:$0xff] %v223
                $region56: #{f_ae_forward.1} parent=50 // loop_footer
                  %s218 = sadd.s32 1, %s214
                $region57: #{f_ae_forward.1} parent=50 // loop_footer_branch
                  %213 = sbr.rel target = $region53
                $region58: #{f_ae_forward.1} parent=50 // loop_exit
                  _
              $region51: #{f_ae_forward.1} parent=35 // pred_fallthru
                _
              // Predicated region
              $region59: #{f_ae_forward.1} parent=35 // pred_check
                _
              $region60: #{f_ae_forward.1} parent=35 // pred_check_branch
                %226 = sbr.rel target = $region62
              $region61: #{f_ae_forward.1} parent=35 // pred_region
                _
              $region62: #{f_ae_forward.1} parent=35 // pred_fallthru
                _
            $region36: #{f_ae_forward.1} parent=31 // pred_fallthru
              _
            // Predicated region
            $region37: #{f_ae_forward.1} parent=31 // pred_check
              _
            $region38: #{f_ae_forward.1} parent=31 // pred_check_branch
              %196 = sbr.rel target = $region40
            $region39: #{f_ae_forward.1} parent=31 // pred_region
              %s198 = ssub.s32 256, 1
              loop: start=0, step=1, limit=1
              $region41: #{f_ae_forward.1} parent=39 // loop_pre_header
                _
              $region42: #{f_ae_forward.1} parent=39 // loop_header
                %s200 = sphi 0, %s204
                %p201 = scmp.ge.s32.totalorder %s200, 1
                %s205 = sphi %s190, %s190
                %s206 = sphi %s187, %s187
              $region43: #{f_ae_forward.1} parent=39 // loop_header_branch
                %203 = sbr.rel (%p201) target = $region47
              $region44: #{f_ae_forward.1} parent=39 // loop_body
                %v207 = vld [vmem:[%s205] sm:%s198]
                %208 = vst [vmem:[%s206] sm:%s198] %v207
                %v209 = vld [vmem:[%s205 + $0x10] sm:%s198]
                %210 = vst [vmem:[%s206 + $0x8] sm:%s198] %v209
              $region45: #{f_ae_forward.1} parent=39 // loop_footer
                %s204 = sadd.s32 1, %s200
              $region46: #{f_ae_forward.1} parent=39 // loop_footer_branch
                %199 = sbr.rel target = $region42
              $region47: #{f_ae_forward.1} parent=39 // loop_exit
                _
            $region40: #{f_ae_forward.1} parent=31 // pred_fallthru
              _
          $region32: #{f_ae_forward.1} parent=27 // pred_fallthru
            _
          %227 = vnop
        $region28: #{f_ae_forward.1} parent=23 // pred_fallthru
          _
      $region24: #{f_ae_forward.1} parent=5 // pred_fallthru
        _
      %p228 = scmp.le.s32.totalorder 1, %s16
      %p229 = scmp.lt.s32.totalorder %s16, 3
      %p230 = pnand %p228, %p229
      %p231 = pneg %p230
      // Predicated region
      $region63: #{f_ae_forward.1} parent=5 // pred_check
        _
      $region64: #{f_ae_forward.1} parent=5 // pred_check_branch
        %233 = sbr.rel (%p230) target = $region66
      $region65: #{f_ae_forward.1} parent=5 // pred_region
        %s234 = ssub.s32 %s16, 1
        %s235 = sand.u32 %s29, 1
        %s236 = sand.u32 %s29, 1
        %s237 = smul.addr %s236, 16
        %s238 = scalar_lea.vmem [#allocation2], %s237
        // Predicated region
        $region67: #{f_ae_forward.1} parent=65 // pred_check
          %p239 = pneg %p42
        $region68: #{f_ae_forward.1} parent=65 // pred_check_branch
          %241 = sbr.rel (%p239) target = $region70
        $region69: #{f_ae_forward.1} parent=65 // pred_region
          _
        $region70: #{f_ae_forward.1} parent=65 // pred_fallthru
          _
        // Predicated region
        $region71: #{f_ae_forward.1} parent=65 // pred_check
          %p242 = pneg %p63
        $region72: #{f_ae_forward.1} parent=65 // pred_check_branch
          %244 = sbr.rel (%p242) target = $region74
        $region73: #{f_ae_forward.1} parent=65 // pred_region
          %245 = dma.done [#allocation4], 3840
        $region74: #{f_ae_forward.1} parent=65 // pred_fallthru
          _
        // Predicated region
        $region75: #{f_ae_forward.1} parent=65 // pred_check
          %p246 = pneg %p84
        $region76: #{f_ae_forward.1} parent=65 // pred_check_branch
          %248 = sbr.rel (%p246) target = $region78
        $region77: #{f_ae_forward.1} parent=65 // pred_region
          %249 = dma.done [#allocation7], 2048
        $region78: #{f_ae_forward.1} parent=65 // pred_fallthru
          _
        %s250 = sand.u32 %s29, 1
        %s251 = sand.u32 %s29, 1
        %s252 = smul.addr %s251, 16
        %s253 = scalar_lea.vmem [#allocation2], %s252
        %p254 = pneg %p42
        %p255 = pneg %p39
        %p256 = pneg %p63
        %p257 = pneg %p60
        %p258 = pneg %p84
        %p259 = pneg %p81
        %p260 = pneg %p110
        %p261 = pneg %p107
        %s262 = sand.u32 %s97, 1
        %s263 = scalar_lea.sflag [#allocation5], %s262
        %s264 = sand.u32 %s97, 1
        %s265 = smul.addr %s264, 32
        %s266 = scalar_lea.vmem [#allocation8], %s265
        %p267 = pneg %p136
        %p268 = pneg %p133
        %s269 = smul.u32 2, %s21
        %p270 = scmp.lt.s32.totalorder %s269, 3
        %s271 = scalar_select %p270, %s269, 3
        %s272 = smul.addr %s271, 8
        %s273 = scalar_lea.vmem %s4, %s272
        %s274 = smul.u32 2, %s21
        %s275 = smul.u32 2, %s21
        %s276 = smul.u32 2, %s21
        %p277 = scmp.lt.s32.totalorder %s276, 3
        %s278 = scalar_select %p277, %s276, 3
        %s279 = smul.addr %s278, 8
        %s280 = scalar_lea.vmem %s4, %s279
        %s281 = smul.u32 2, %s21
        %v283 = vld [vmem:[%s238] sm:$0xff]
        %v284 = vld [vmem:[%s238 + $0x8] sm:$0xff]
        %v285 = vld [vmem:[#allocation6] sm:$0xff]
        %v286 = vld [vmem:[#allocation6 + $0x8] sm:$0xff]
        %v287 = vld [vmem:[#allocation6 + $0x10] sm:$0xff]
        %v288 = vld [vmem:[#allocation6 + $0x18] sm:$0xff]
        %v289 = vld [vmem:[#allocation6 + $0x20] sm:$0xff]
        %v290 = vld [vmem:[#allocation6 + $0x28] sm:$0xff]
        %v291 = vld [vmem:[#allocation6 + $0x30] sm:$0xff]
        %v292 = vld [vmem:[#allocation6 + $0x38] sm:$0xff]
        %v293 = vld [vmem:[#allocation6 + $0x40] sm:$0xff]
        %v294 = vld [vmem:[#allocation6 + $0x48] sm:$0xff]
        %v295 = vld [vmem:[#allocation6 + $0x50] sm:$0xff]
        %v296 = vld [vmem:[#allocation6 + $0x58] sm:$0xff]
        %v297 = vld [vmem:[#allocation6 + $0x60] sm:$0xff]
        %v298 = vld [vmem:[#allocation6 + $0x68] sm:$0xff]
        %v299 = vld [vmem:[#allocation3] sm:$0xf]
        %v300 = vld [vmem:[#allocation3 + $0x4] sm:$0xf]
        %v301 = vld [vmem:[#allocation3 + $0x8] sm:$0xf]
        %v302 = vld [vmem:[#allocation3 + $0xc] sm:$0xf]
        %v303 = vld [vmem:[#allocation3 + $0x10] sm:$0xf]
        %v304 = vld [vmem:[#allocation3 + $0x14] sm:$0xf]
        %v305 = vld [vmem:[#allocation3 + $0x18] sm:$0xf]
        %v306 = vld [vmem:[#allocation3 + $0x1c] sm:$0xf]
        %v307 = vld [vmem:[#allocation3 + $0x20] sm:$0xf]
        %v308 = vld [vmem:[#allocation3 + $0x24] sm:$0xf]
        %v309 = vld [vmem:[#allocation3 + $0x28] sm:$0xf]
        %v310 = vld [vmem:[#allocation3 + $0x2c] sm:$0xf]
        %v311 = vld [vmem:[#allocation3 + $0x30] sm:$0xf]
        %v312 = vld [vmem:[#allocation3 + $0x34] sm:$0xf]
        %314 = vset.pattern.permute.xlu0 0
        %315 = vperm.xlu0 %314, %v285
        %v316 = vpop.permute.xlu0 %315
        %319 = vset.pattern.permute.xlu0 0
        %320 = vperm.xlu0 %319, %v286
        %v321 = vpop.permute.xlu0 %320
        %324 = vset.pattern.permute.xlu0 0
        %325 = vperm.xlu0 %324, %v287
        %v326 = vpop.permute.xlu0 %325
        %329 = vset.pattern.permute.xlu0 0
        %330 = vperm.xlu0 %329, %v288
        %v331 = vpop.permute.xlu0 %330
        %334 = vset.pattern.permute.xlu0 0
        %335 = vperm.xlu0 %334, %v289
        %v336 = vpop.permute.xlu0 %335
        %339 = vset.pattern.permute.xlu0 0
        %340 = vperm.xlu0 %339, %v290
        %v341 = vpop.permute.xlu0 %340
        %344 = vset.pattern.permute.xlu0 0
        %345 = vperm.xlu0 %344, %v291
        %v346 = vpop.permute.xlu0 %345
        %349 = vset.pattern.permute.xlu0 0
        %350 = vperm.xlu0 %349, %v292
        %v351 = vpop.permute.xlu0 %350
        %354 = vset.pattern.permute.xlu0 0
        %355 = vperm.xlu0 %354, %v293
        %v356 = vpop.permute.xlu0 %355
        %359 = vset.pattern.permute.xlu0 0
        %360 = vperm.xlu0 %359, %v294
        %v361 = vpop.permute.xlu0 %360
        %364 = vset.pattern.permute.xlu0 0
        %365 = vperm.xlu0 %364, %v295
        %v366 = vpop.permute.xlu0 %365
        %369 = vset.pattern.permute.xlu0 0
        %370 = vperm.xlu0 %369, %v296
        %v371 = vpop.permute.xlu0 %370
        %374 = vset.pattern.permute.xlu0 0
        %375 = vperm.xlu0 %374, %v297
        %v376 = vpop.permute.xlu0 %375
        %379 = vset.pattern.permute.xlu0 0
        %380 = vperm.xlu0 %379, %v298
        %v381 = vpop.permute.xlu0 %380
        %v397 = vunpack.c.l.b16 %v299
        %v398 = vunpack.c.l.b16 %v300
        %v399 = vunpack.c.l.b16 %v301
        %v400 = vunpack.c.l.b16 %v302
        %v401 = vunpack.c.l.b16 %v303
        %v402 = vunpack.c.l.b16 %v304
        %v403 = vunpack.c.l.b16 %v305
        %v404 = vunpack.c.l.b16 %v306
        %v405 = vunpack.c.l.b16 %v307
        %v406 = vunpack.c.l.b16 %v308
        %v407 = vunpack.c.l.b16 %v309
        %v408 = vunpack.c.l.b16 %v310
        %v409 = vunpack.c.l.b16 %v311
        %v410 = vunpack.c.l.b16 %v312
        %v411 = vpack.c.b16 %v398, %v397
        %v412 = vpack.c.b16 %v400, %v399
        %v413 = vpack.c.b16 %v402, %v401
        %v414 = vpack.c.b16 %v404, %v403
        %v415 = vpack.c.b16 %v406, %v405
        %v416 = vpack.c.b16 %v408, %v407
        %v417 = vpack.c.b16 %v410, %v409
        %v420 = vunpack.c.l.b16 %v283
        %v421 = vunpack.c.h.b16 %v283
        %v422 = vunpack.c.l.b16 %v284
        %v423 = vunpack.c.h.b16 %v284
        %v424 = vpack.c.b16 %v422, %v420
        %v425 = vpack.c.b16 %v423, %v421
        %vm428 = vcmask 130048
        %v430 = vsel %vm428, %v411, 0
        %v433 = vsel %vm428, %v412, 0
        %v436 = vsel %vm428, %v413, 0
        %v439 = vsel %vm428, %v414, 0
        %v442 = vsel %vm428, %v415, 0
        %v445 = vsel %vm428, %v416, 0
        %v448 = vsel %vm428, %v417, 0
        %450 = vmatprep.subr.bf16.mxu0 0
        %451 = vmatpush1.bf16.msra.mxu0 0
        %452 = vmatprep.subr.bf16.mxu0 0
        %453 = vmatpush1.bf16.msra.mxu0 0
        %454 = vmatprep.subr.bf16.mxu0 0
        %455 = vmatpush1.bf16.msra.mxu0 0
        %456 = vmatprep.subr.bf16.mxu0 0
        %457 = vmatpush1.bf16.msra.mxu0 0
        %458 = vmatprep.subr.bf16.mxu0 0
        %459 = vmatpush1.bf16.msra.mxu0 0
        %460 = vmatprep.subr.bf16.mxu0 0
        %461 = vmatpush1.bf16.msra.mxu0 0
        %462 = vmatprep.subr.bf16.mxu0 0
        %463 = vmatpush1.bf16.msra.mxu0 0
        %464 = vmatprep.subr.bf16.mxu0 %v425
        %465 = vmatpush1.bf16.msra.mxu0 %v424
        %466 = vmatprep.subr.bf16.mxu0 0
        %467 = vmatpush2.bf16.msra.mxu0 0
        %468 = vmatprep.subr.bf16.mxu0 0
        %469 = vmatpush2.bf16.msra.mxu0 0
        %470 = vmatprep.subr.bf16.mxu0 0
        %471 = vmatpush2.bf16.msra.mxu0 0
        %472 = vmatprep.subr.bf16.mxu0 0
        %473 = vmatpush2.bf16.msra.mxu0 0
        %474 = vmatprep.subr.bf16.mxu0 0
        %475 = vmatpush2.bf16.msra.mxu0 0
        %476 = vmatprep.subr.bf16.mxu0 0
        %477 = vmatpush2.bf16.msra.mxu0 0
        %478 = vmatprep.subr.bf16.mxu0 0
        %479 = vmatpush2.bf16.msra.mxu0 0
        %480 = vmatprep.subr.bf16.mxu0 0
        %481 = vmatpush2.bf16.msra.mxu0 0
        %482 = vmatprep.mubr.bf16.mxu0 0
        %483 = vmatmul.mubr.bf16.gmra.mxu0 %v430
        %v484 = vpop.f32.mrf.mxu0
        %v485 = vadd.f32 %v316, %v484
        %v486 = vpop.f32.mrf.mxu0
        %v487 = vadd.f32 %v316, %v486
        %v488 = vpop.f32.mrf.mxu0
        %v489 = vadd.f32 %v321, %v488
        %v490 = vpop.f32.mrf.mxu0
        %v491 = vadd.f32 %v321, %v490
        %492 = vmatprep.mubr.bf16.mxu0 0
        %493 = vmatmul.mubr.bf16.gmra.mxu0 %v433
        %v494 = vpop.f32.mrf.mxu0
        %v495 = vadd.f32 %v326, %v494
        %v496 = vpop.f32.mrf.mxu0
        %v497 = vadd.f32 %v326, %v496
        %v498 = vpop.f32.mrf.mxu0
        %v499 = vadd.f32 %v331, %v498
        %v500 = vpop.f32.mrf.mxu0
        %v501 = vadd.f32 %v331, %v500
        %502 = vmatprep.mubr.bf16.mxu0 0
        %503 = vmatmul.mubr.bf16.gmra.mxu0 %v436
        %v504 = vpop.f32.mrf.mxu0
        %v505 = vadd.f32 %v336, %v504
        %v506 = vpop.f32.mrf.mxu0
        %v507 = vadd.f32 %v336, %v506
        %v508 = vpop.f32.mrf.mxu0
        %v509 = vadd.f32 %v341, %v508
        %v510 = vpop.f32.mrf.mxu0
        %v511 = vadd.f32 %v341, %v510
        %512 = vmatprep.mubr.bf16.mxu0 0
        %513 = vmatmul.mubr.bf16.gmra.mxu0 %v439
        %v514 = vpop.f32.mrf.mxu0
        %v515 = vadd.f32 %v346, %v514
        %v516 = vpop.f32.mrf.mxu0
        %v517 = vadd.f32 %v346, %v516
        %v518 = vpop.f32.mrf.mxu0
        %v519 = vadd.f32 %v351, %v518
        %v520 = vpop.f32.mrf.mxu0
        %v521 = vadd.f32 %v351, %v520
        %522 = vmatprep.mubr.bf16.mxu0 0
        %523 = vmatmul.mubr.bf16.gmra.mxu0 %v442
        %v524 = vpop.f32.mrf.mxu0
        %v525 = vadd.f32 %v356, %v524
        %v526 = vpop.f32.mrf.mxu0
        %v527 = vadd.f32 %v356, %v526
        %v528 = vpop.f32.mrf.mxu0
        %v529 = vadd.f32 %v361, %v528
        %v530 = vpop.f32.mrf.mxu0
        %v531 = vadd.f32 %v361, %v530
        %532 = vmatprep.mubr.bf16.mxu0 0
        %533 = vmatmul.mubr.bf16.gmra.mxu0 %v445
        %v534 = vpop.f32.mrf.mxu0
        %v535 = vadd.f32 %v366, %v534
        %v536 = vpop.f32.mrf.mxu0
        %v537 = vadd.f32 %v366, %v536
        %v538 = vpop.f32.mrf.mxu0
        %v539 = vadd.f32 %v371, %v538
        %v540 = vpop.f32.mrf.mxu0
        %v541 = vadd.f32 %v371, %v540
        %542 = vmatprep.mubr.bf16.mxu0 0
        %543 = vmatmul.mubr.bf16.gmra.mxu0 %v448
        %v544 = vpop.f32.mrf.mxu0
        %v545 = vadd.f32 %v376, %v544
        %v546 = vpop.f32.mrf.mxu0
        %v547 = vadd.f32 %v376, %v546
        %v548 = vpop.f32.mrf.mxu0
        %v549 = vadd.f32 %v381, %v548
        %v550 = vpop.f32.mrf.mxu0
        %v551 = vadd.f32 %v381, %v550
        %552 = vdwg.mxu0
        %v553 = vmax.f32 %v485, 0.0
        %v554 = vmax.f32 %v487, 0.0
        %v555 = vmax.f32 %v489, 0.0
        %v556 = vmax.f32 %v491, 0.0
        %v557 = vmax.f32 %v495, 0.0
        %v558 = vmax.f32 %v497, 0.0
        %v559 = vmax.f32 %v499, 0.0
        %v560 = vmax.f32 %v501, 0.0
        %v561 = vmax.f32 %v505, 0.0
        %v562 = vmax.f32 %v507, 0.0
        %v563 = vmax.f32 %v509, 0.0
        %v564 = vmax.f32 %v511, 0.0
        %v565 = vmax.f32 %v515, 0.0
        %v566 = vmax.f32 %v517, 0.0
        %v567 = vmax.f32 %v519, 0.0
        %v568 = vmax.f32 %v521, 0.0
        %v569 = vmax.f32 %v525, 0.0
        %v570 = vmax.f32 %v527, 0.0
        %v571 = vmax.f32 %v529, 0.0
        %v572 = vmax.f32 %v531, 0.0
        %v573 = vmax.f32 %v535, 0.0
        %v574 = vmax.f32 %v537, 0.0
        %v575 = vmax.f32 %v539, 0.0
        %v576 = vmax.f32 %v541, 0.0
        %v577 = vmax.f32 %v545, 0.0
        %v578 = vmax.f32 %v547, 0.0
        %v579 = vmax.f32 %v549, 0.0
        %v580 = vmax.f32 %v551, 0.0
        %v581 = vld [vmem:[#allocation3 + $0x38] sm:$0xf]
        %v582 = vld [vmem:[#allocation3 + $0x3c] sm:$0xf]
        %v583 = vld [vmem:[#allocation3 + $0x40] sm:$0xf]
        %v584 = vld [vmem:[#allocation3 + $0x44] sm:$0xf]
        %v585 = vld [vmem:[#allocation3 + $0x48] sm:$0xf]
        %v586 = vld [vmem:[#allocation3 + $0x4c] sm:$0xf]
        %v587 = vld [vmem:[#allocation3 + $0x50] sm:$0xf]
        %v588 = vld [vmem:[#allocation3 + $0x54] sm:$0xf]
        %v589 = vpack.c.bf16 %v555, %v553
        %v590 = vpack.c.bf16 %v556, %v554
        %v591 = vpack.c.bf16 %v559, %v557
        %v592 = vpack.c.bf16 %v560, %v558
        %v593 = vpack.c.bf16 %v563, %v561
        %v594 = vpack.c.bf16 %v564, %v562
        %v595 = vpack.c.bf16 %v567, %v565
        %v596 = vpack.c.bf16 %v568, %v566
        %v597 = vpack.c.bf16 %v571, %v569
        %v598 = vpack.c.bf16 %v572, %v570
        %v599 = vpack.c.bf16 %v575, %v573
        %v600 = vpack.c.bf16 %v576, %v574
        %v601 = vpack.c.bf16 %v579, %v577
        %v602 = vpack.c.bf16 %v580, %v578
        %603 = vset.pattern.permute.xlu0 1
        %604 = vperm.xlu0 %603, %v285
        %v605 = vpop.permute.xlu0 %604
        %607 = vset.pattern.permute.xlu0 1
        %608 = vperm.xlu0 %607, %v286
        %v609 = vpop.permute.xlu0 %608
        %611 = vset.pattern.permute.xlu0 1
        %612 = vperm.xlu0 %611, %v287
        %v613 = vpop.permute.xlu0 %612
        %615 = vset.pattern.permute.xlu0 1
        %616 = vperm.xlu0 %615, %v288
        %v617 = vpop.permute.xlu0 %616
        %619 = vset.pattern.permute.xlu0 1
        %620 = vperm.xlu0 %619, %v289
        %v621 = vpop.permute.xlu0 %620
        %623 = vset.pattern.permute.xlu0 1
        %624 = vperm.xlu0 %623, %v290
        %v625 = vpop.permute.xlu0 %624
        %627 = vset.pattern.permute.xlu0 1
        %628 = vperm.xlu0 %627, %v291
        %v629 = vpop.permute.xlu0 %628
        %631 = vset.pattern.permute.xlu0 1
        %632 = vperm.xlu0 %631, %v292
        %v633 = vpop.permute.xlu0 %632
        %v643 = vunpack.c.l.b16 %v581
        %v644 = vunpack.c.l.b16 %v582
        %v645 = vunpack.c.l.b16 %v583
        %v646 = vunpack.c.l.b16 %v584
        %v647 = vunpack.c.l.b16 %v585
        %v648 = vunpack.c.l.b16 %v586
        %v649 = vunpack.c.l.b16 %v587
        %v650 = vunpack.c.l.b16 %v588
        %v651 = vpack.c.b16 %v644, %v643
        %v652 = vpack.c.b16 %v646, %v645
        %v653 = vpack.c.b16 %v648, %v647
        %v654 = vpack.c.b16 %v650, %v649
        %vm655 = vcmask 916480
        %v657 = vsel %vm655, %v651, 0
        %v660 = vsel %vm655, %v652, 0
        %v663 = vsel %vm655, %v653, 0
        %v666 = vsel %vm655, %v654, 0
        %668 = vmatprep.subr.bf16.mxu0 0
        %669 = vmatpush1.bf16.msra.mxu0 0
        %670 = vmatprep.subr.bf16.mxu0 %v602
        %671 = vmatpush1.bf16.msra.mxu0 %v601
        %672 = vmatprep.subr.bf16.mxu0 %v600
        %673 = vmatpush1.bf16.msra.mxu0 %v599
        %674 = vmatprep.subr.bf16.mxu0 %v598
        %675 = vmatpush1.bf16.msra.mxu0 %v597
        %676 = vmatprep.subr.bf16.mxu0 %v596
        %677 = vmatpush1.bf16.msra.mxu0 %v595
        %678 = vmatprep.subr.bf16.mxu0 %v594
        %679 = vmatpush1.bf16.msra.mxu0 %v593
        %680 = vmatprep.subr.bf16.mxu0 %v592
        %681 = vmatpush1.bf16.msra.mxu0 %v591
        %682 = vmatprep.subr.bf16.mxu0 %v590
        %683 = vmatpush1.bf16.msra.mxu0 %v589
        %684 = vmatprep.subr.bf16.mxu0 0
        %685 = vmatpush2.bf16.msra.mxu0 0
        %686 = vmatprep.subr.bf16.mxu0 0
        %687 = vmatpush2.bf16.msra.mxu0 0
        %688 = vmatprep.subr.bf16.mxu0 0
        %689 = vmatpush2.bf16.msra.mxu0 0
        %690 = vmatprep.subr.bf16.mxu0 0
        %691 = vmatpush2.bf16.msra.mxu0 0
        %692 = vmatprep.subr.bf16.mxu0 0
        %693 = vmatpush2.bf16.msra.mxu0 0
        %694 = vmatprep.subr.bf16.mxu0 0
        %695 = vmatpush2.bf16.msra.mxu0 0
        %696 = vmatprep.subr.bf16.mxu0 0
        %697 = vmatpush2.bf16.msra.mxu0 0
        %698 = vmatprep.subr.bf16.mxu0 0
        %699 = vmatpush2.bf16.msra.mxu0 0
        %700 = vmatprep.mubr.bf16.mxu0 0
        %701 = vmatmul.mubr.bf16.gmra.mxu0 %v657
        %v702 = vpop.f32.mrf.mxu0
        %v703 = vadd.f32 %v605, %v702
        %v704 = vpop.f32.mrf.mxu0
        %v705 = vadd.f32 %v605, %v704
        %v706 = vpop.f32.mrf.mxu0
        %v707 = vadd.f32 %v609, %v706
        %v708 = vpop.f32.mrf.mxu0
        %v709 = vadd.f32 %v609, %v708
        %710 = vmatprep.mubr.bf16.mxu0 0
        %711 = vmatmul.mubr.bf16.gmra.mxu0 %v660
        %v712 = vpop.f32.mrf.mxu0
        %v713 = vadd.f32 %v613, %v712
        %v714 = vpop.f32.mrf.mxu0
        %v715 = vadd.f32 %v613, %v714
        %v716 = vpop.f32.mrf.mxu0
        %v717 = vadd.f32 %v617, %v716
        %v718 = vpop.f32.mrf.mxu0
        %v719 = vadd.f32 %v617, %v718
        %720 = vmatprep.mubr.bf16.mxu0 0
        %721 = vmatmul.mubr.bf16.gmra.mxu0 %v663
        %v722 = vpop.f32.mrf.mxu0
        %v723 = vadd.f32 %v621, %v722
        %v724 = vpop.f32.mrf.mxu0
        %v725 = vadd.f32 %v621, %v724
        %v726 = vpop.f32.mrf.mxu0
        %v727 = vadd.f32 %v625, %v726
        %v728 = vpop.f32.mrf.mxu0
        %v729 = vadd.f32 %v625, %v728
        %730 = vmatprep.mubr.bf16.mxu0 0
        %731 = vmatmul.mubr.bf16.gmra.mxu0 %v666
        %v732 = vpop.f32.mrf.mxu0
        %v733 = vadd.f32 %v629, %v732
        %v734 = vpop.f32.mrf.mxu0
        %v735 = vadd.f32 %v629, %v734
        %v736 = vpop.f32.mrf.mxu0
        %v737 = vadd.f32 %v633, %v736
        %v738 = vpop.f32.mrf.mxu0
        %v739 = vadd.f32 %v633, %v738
        %740 = vdwg.mxu0
        %v741 = vmax.f32 %v703, 0.0
        %v742 = vmax.f32 %v705, 0.0
        %v743 = vmax.f32 %v707, 0.0
        %v744 = vmax.f32 %v709, 0.0
        %v745 = vmax.f32 %v713, 0.0
        %v746 = vmax.f32 %v715, 0.0
        %v747 = vmax.f32 %v717, 0.0
        %v748 = vmax.f32 %v719, 0.0
        %v749 = vmax.f32 %v723, 0.0
        %v750 = vmax.f32 %v725, 0.0
        %v751 = vmax.f32 %v727, 0.0
        %v752 = vmax.f32 %v729, 0.0
        %v753 = vmax.f32 %v733, 0.0
        %v754 = vmax.f32 %v735, 0.0
        %v755 = vmax.f32 %v737, 0.0
        %v756 = vmax.f32 %v739, 0.0
        %v757 = vld [vmem:[#allocation3 + $0x58] sm:$0xf]
        %v758 = vld [vmem:[#allocation3 + $0x5c] sm:$0xf]
        %v759 = vld [vmem:[#allocation3 + $0x60] sm:$0xf]
        %v760 = vld [vmem:[#allocation3 + $0x64] sm:$0xf]
        %v761 = vpack.c.bf16 %v743, %v741
        %v762 = vpack.c.bf16 %v744, %v742
        %v763 = vpack.c.bf16 %v747, %v745
        %v764 = vpack.c.bf16 %v748, %v746
        %v765 = vpack.c.bf16 %v751, %v749
        %v766 = vpack.c.bf16 %v752, %v750
        %v767 = vpack.c.bf16 %v755, %v753
        %v768 = vpack.c.bf16 %v756, %v754
        %769 = vset.pattern.permute.xlu0 2
        %770 = vperm.xlu0 %769, %v285
        %v771 = vpop.permute.xlu0 %770
        %773 = vset.pattern.permute.xlu0 2
        %774 = vperm.xlu0 %773, %v286
        %v775 = vpop.permute.xlu0 %774
        %777 = vset.pattern.permute.xlu0 2
        %778 = vperm.xlu0 %777, %v287
        %v779 = vpop.permute.xlu0 %778
        %781 = vset.pattern.permute.xlu0 2
        %782 = vperm.xlu0 %781, %v288
        %v783 = vpop.permute.xlu0 %782
        %v789 = vunpack.c.l.b16 %v757
        %v790 = vunpack.c.l.b16 %v758
        %v791 = vunpack.c.l.b16 %v759
        %v792 = vunpack.c.l.b16 %v760
        %v793 = vpack.c.b16 %v790, %v789
        %v794 = vpack.c.b16 %v792, %v791
        %vm795 = vcmask 523264
        %v797 = vsel %vm795, %v793, 0
        %v800 = vsel %vm795, %v794, 0
        %802 = vmatprep.subr.bf16.mxu0 0
        %803 = vmatpush1.bf16.msra.mxu0 0
        %804 = vmatprep.subr.bf16.mxu0 0
        %805 = vmatpush1.bf16.msra.mxu0 0
        %806 = vmatprep.subr.bf16.mxu0 0
        %807 = vmatpush1.bf16.msra.mxu0 0
        %808 = vmatprep.subr.bf16.mxu0 0
        %809 = vmatpush1.bf16.msra.mxu0 0
        %810 = vmatprep.subr.bf16.mxu0 %v768
        %811 = vmatpush1.bf16.msra.mxu0 %v767
        %812 = vmatprep.subr.bf16.mxu0 %v766
        %813 = vmatpush1.bf16.msra.mxu0 %v765
        %814 = vmatprep.subr.bf16.mxu0 %v764
        %815 = vmatpush1.bf16.msra.mxu0 %v763
        %816 = vmatprep.subr.bf16.mxu0 %v762
        %817 = vmatpush1.bf16.msra.mxu0 %v761
        %818 = vmatprep.subr.bf16.mxu0 0
        %819 = vmatpush2.bf16.msra.mxu0 0
        %820 = vmatprep.subr.bf16.mxu0 0
        %821 = vmatpush2.bf16.msra.mxu0 0
        %822 = vmatprep.subr.bf16.mxu0 0
        %823 = vmatpush2.bf16.msra.mxu0 0
        %824 = vmatprep.subr.bf16.mxu0 0
        %825 = vmatpush2.bf16.msra.mxu0 0
        %826 = vmatprep.subr.bf16.mxu0 0
        %827 = vmatpush2.bf16.msra.mxu0 0
        %828 = vmatprep.subr.bf16.mxu0 0
        %829 = vmatpush2.bf16.msra.mxu0 0
        %830 = vmatprep.subr.bf16.mxu0 0
        %831 = vmatpush2.bf16.msra.mxu0 0
        %832 = vmatprep.subr.bf16.mxu0 0
        %833 = vmatpush2.bf16.msra.mxu0 0
        %834 = vmatprep.mubr.bf16.mxu0 0
        %835 = vmatmul.mubr.bf16.gmra.mxu0 %v797
        %v836 = vpop.f32.mrf.mxu0
        %v837 = vadd.f32 %v771, %v836
        %v838 = vpop.f32.mrf.mxu0
        %v839 = vadd.f32 %v771, %v838
        %v840 = vpop.f32.mrf.mxu0
        %v841 = vadd.f32 %v775, %v840
        %v842 = vpop.f32.mrf.mxu0
        %v843 = vadd.f32 %v775, %v842
        %844 = vmatprep.mubr.bf16.mxu0 0
        %845 = vmatmul.mubr.bf16.gmra.mxu0 %v800
        %v846 = vpop.f32.mrf.mxu0
        %v847 = vadd.f32 %v779, %v846
        %v848 = vpop.f32.mrf.mxu0
        %v849 = vadd.f32 %v779, %v848
        %v850 = vpop.f32.mrf.mxu0
        %v851 = vadd.f32 %v783, %v850
        %v852 = vpop.f32.mrf.mxu0
        %v853 = vadd.f32 %v783, %v852
        %854 = vdwg.mxu0
        %v855 = vmax.f32 %v837, 0.0
        %v856 = vmax.f32 %v839, 0.0
        %v857 = vmax.f32 %v841, 0.0
        %v858 = vmax.f32 %v843, 0.0
        %v859 = vmax.f32 %v847, 0.0
        %v860 = vmax.f32 %v849, 0.0
        %v861 = vmax.f32 %v851, 0.0
        %v862 = vmax.f32 %v853, 0.0
        %v863 = vld [vmem:[#allocation3 + $0x68] sm:$0xf]
        %v864 = vld [vmem:[#allocation3 + $0x6c] sm:$0xf]
        %v865 = vpack.c.bf16 %v857, %v855
        %v866 = vpack.c.bf16 %v858, %v856
        %v867 = vpack.c.bf16 %v861, %v859
        %v868 = vpack.c.bf16 %v862, %v860
        %869 = vset.pattern.permute.xlu0 3
        %870 = vperm.xlu0 %869, %v285
        %v871 = vpop.permute.xlu0 %870
        %873 = vset.pattern.permute.xlu0 3
        %874 = vperm.xlu0 %873, %v286
        %v875 = vpop.permute.xlu0 %874
        %v879 = vunpack.c.l.b16 %v863
        %v880 = vunpack.c.l.b16 %v864
        %v881 = vpack.c.b16 %v880, %v879
        %vm882 = vcmask 261120
        %v884 = vsel %vm882, %v881, 0
        %886 = vmatprep.subr.bf16.mxu0 0
        %887 = vmatpush1.bf16.msra.mxu0 0
        %888 = vmatprep.subr.bf16.mxu0 0
        %889 = vmatpush1.bf16.msra.mxu0 0
        %890 = vmatprep.subr.bf16.mxu0 0
        %891 = vmatpush1.bf16.msra.mxu0 0
        %892 = vmatprep.subr.bf16.mxu0 0
        %893 = vmatpush1.bf16.msra.mxu0 0
        %894 = vmatprep.subr.bf16.mxu0 0
        %895 = vmatpush1.bf16.msra.mxu0 0
        %896 = vmatprep.subr.bf16.mxu0 0
        %897 = vmatpush1.bf16.msra.mxu0 0
        %898 = vmatprep.subr.bf16.mxu0 %v868
        %899 = vmatpush1.bf16.msra.mxu0 %v867
        %900 = vmatprep.subr.bf16.mxu0 %v866
        %901 = vmatpush1.bf16.msra.mxu0 %v865
        %902 = vmatprep.subr.bf16.mxu0 0
        %903 = vmatpush2.bf16.msra.mxu0 0
        %904 = vmatprep.subr.bf16.mxu0 0
        %905 = vmatpush2.bf16.msra.mxu0 0
        %906 = vmatprep.subr.bf16.mxu0 0
        %907 = vmatpush2.bf16.msra.mxu0 0
        %908 = vmatprep.subr.bf16.mxu0 0
        %909 = vmatpush2.bf16.msra.mxu0 0
        %910 = vmatprep.subr.bf16.mxu0 0
        %911 = vmatpush2.bf16.msra.mxu0 0
        %912 = vmatprep.subr.bf16.mxu0 0
        %913 = vmatpush2.bf16.msra.mxu0 0
        %914 = vmatprep.subr.bf16.mxu0 0
        %915 = vmatpush2.bf16.msra.mxu0 0
        %916 = vmatprep.subr.bf16.mxu0 0
        %917 = vmatpush2.bf16.msra.mxu0 0
        %918 = vmatprep.mubr.bf16.mxu0 0
        %919 = vmatmul.mubr.bf16.gmra.mxu0 %v884
        %v920 = vpop.f32.mrf.mxu0
        %v921 = vadd.f32 %v871, %v920
        %v922 = vpop.f32.mrf.mxu0
        %v923 = vadd.f32 %v871, %v922
        %v924 = vpop.f32.mrf.mxu0
        %v925 = vadd.f32 %v875, %v924
        %v926 = vpop.f32.mrf.mxu0
        %v927 = vadd.f32 %v875, %v926
        %928 = vdwg.mxu0
        %v929 = vmax.f32 %v921, 0.0
        %v930 = vmax.f32 %v923, 0.0
        %v931 = vmax.f32 %v925, 0.0
        %v932 = vmax.f32 %v927, 0.0
        %v933 = vld [vmem:[#allocation3 + $0x70] sm:$0xf]
        %v934 = vld [vmem:[#allocation3 + $0x74] sm:$0xf]
        %v935 = vpack.c.bf16 %v931, %v929
        %v936 = vpack.c.bf16 %v932, %v930
        %937 = vset.pattern.permute.xlu0 4
        %938 = vperm.xlu0 %937, %v285
        %v939 = vpop.permute.xlu0 %938
        %941 = vset.pattern.permute.xlu0 4
        %942 = vperm.xlu0 %941, %v286
        %v943 = vpop.permute.xlu0 %942
        %v947 = vunpack.c.l.b16 %v933
        %v948 = vunpack.c.l.b16 %v934
        %v949 = vpack.c.b16 %v948, %v947
        %v951 = vsel %vm428, %v949, 0
        %953 = vmatprep.subr.bf16.mxu0 0
        %954 = vmatpush1.bf16.msra.mxu0 0
        %955 = vmatprep.subr.bf16.mxu0 0
        %956 = vmatpush1.bf16.msra.mxu0 0
        %957 = vmatprep.subr.bf16.mxu0 0
        %958 = vmatpush1.bf16.msra.mxu0 0
        %959 = vmatprep.subr.bf16.mxu0 0
        %960 = vmatpush1.bf16.msra.mxu0 0
        %961 = vmatprep.subr.bf16.mxu0 0
        %962 = vmatpush1.bf16.msra.mxu0 0
        %963 = vmatprep.subr.bf16.mxu0 0
        %964 = vmatpush1.bf16.msra.mxu0 0
        %965 = vmatprep.subr.bf16.mxu0 0
        %966 = vmatpush1.bf16.msra.mxu0 0
        %967 = vmatprep.subr.bf16.mxu0 %v936
        %968 = vmatpush1.bf16.msra.mxu0 %v935
        %969 = vmatprep.subr.bf16.mxu0 0
        %970 = vmatpush2.bf16.msra.mxu0 0
        %971 = vmatprep.subr.bf16.mxu0 0
        %972 = vmatpush2.bf16.msra.mxu0 0
        %973 = vmatprep.subr.bf16.mxu0 0
        %974 = vmatpush2.bf16.msra.mxu0 0
        %975 = vmatprep.subr.bf16.mxu0 0
        %976 = vmatpush2.bf16.msra.mxu0 0
        %977 = vmatprep.subr.bf16.mxu0 0
        %978 = vmatpush2.bf16.msra.mxu0 0
        %979 = vmatprep.subr.bf16.mxu0 0
        %980 = vmatpush2.bf16.msra.mxu0 0
        %981 = vmatprep.subr.bf16.mxu0 0
        %982 = vmatpush2.bf16.msra.mxu0 0
        %983 = vmatprep.subr.bf16.mxu0 0
        %984 = vmatpush2.bf16.msra.mxu0 0
        %985 = vmatprep.mubr.bf16.mxu0 0
        %986 = vmatmul.mubr.bf16.gmra.mxu0 %v951
        %v987 = vpop.f32.mrf.mxu0
        %v988 = vadd.f32 %v939, %v987
        %v989 = vpop.f32.mrf.mxu0
        %v990 = vadd.f32 %v939, %v989
        %v991 = vpop.f32.mrf.mxu0
        %v992 = vadd.f32 %v943, %v991
        %v993 = vpop.f32.mrf.mxu0
        %v994 = vadd.f32 %v943, %v993
        %995 = vdwg.mxu0
        %v996 = vld [vmem:[#allocation3 + $0x78] sm:$0xf]
        %v997 = vld [vmem:[#allocation3 + $0x7c] sm:$0xf]
        %v998 = vpack.c.bf16 %v992, %v988
        %v999 = vpack.c.bf16 %v994, %v990
        %1000 = vset.pattern.permute.xlu0 5
        %1001 = vperm.xlu0 %1000, %v285
        %v1002 = vpop.permute.xlu0 %1001
        %1004 = vset.pattern.permute.xlu0 5
        %1005 = vperm.xlu0 %1004, %v286
        %v1006 = vpop.permute.xlu0 %1005
        %v1010 = vunpack.c.l.b16 %v996
        %v1011 = vunpack.c.l.b16 %v997
        %v1012 = vpack.c.b16 %v1011, %v1010
        %v1014 = vsel %vm428, %v1012, 0
        %1016 = vmatprep.subr.bf16.mxu0 0
        %1017 = vmatpush1.bf16.msra.mxu0 0
        %1018 = vmatprep.subr.bf16.mxu0 0
        %1019 = vmatpush1.bf16.msra.mxu0 0
        %1020 = vmatprep.subr.bf16.mxu0 0
        %1021 = vmatpush1.bf16.msra.mxu0 0
        %1022 = vmatprep.subr.bf16.mxu0 0
        %1023 = vmatpush1.bf16.msra.mxu0 0
        %1024 = vmatprep.subr.bf16.mxu0 0
        %1025 = vmatpush1.bf16.msra.mxu0 0
        %1026 = vmatprep.subr.bf16.mxu0 0
        %1027 = vmatpush1.bf16.msra.mxu0 0
        %1028 = vmatprep.subr.bf16.mxu0 0
        %1029 = vmatpush1.bf16.msra.mxu0 0
        %1030 = vmatprep.subr.bf16.mxu0 %v999
        %1031 = vmatpush1.bf16.msra.mxu0 %v998
        %1032 = vmatprep.subr.bf16.mxu0 0
        %1033 = vmatpush2.bf16.msra.mxu0 0
        %1034 = vmatprep.subr.bf16.mxu0 0
        %1035 = vmatpush2.bf16.msra.mxu0 0
        %1036 = vmatprep.subr.bf16.mxu0 0
        %1037 = vmatpush2.bf16.msra.mxu0 0
        %1038 = vmatprep.subr.bf16.mxu0 0
        %1039 = vmatpush2.bf16.msra.mxu0 0
        %1040 = vmatprep.subr.bf16.mxu0 0
        %1041 = vmatpush2.bf16.msra.mxu0 0
        %1042 = vmatprep.subr.bf16.mxu0 0
        %1043 = vmatpush2.bf16.msra.mxu0 0
        %1044 = vmatprep.subr.bf16.mxu0 0
        %1045 = vmatpush2.bf16.msra.mxu0 0
        %1046 = vmatprep.subr.bf16.mxu0 0
        %1047 = vmatpush2.bf16.msra.mxu0 0
        %1048 = vmatprep.mubr.bf16.mxu0 0
        %1049 = vmatmul.mubr.bf16.gmra.mxu0 %v1014
        %v1050 = vpop.f32.mrf.mxu0
        %v1051 = vadd.f32 %v1002, %v1050
        %v1052 = vpop.f32.mrf.mxu0
        %v1053 = vadd.f32 %v1002, %v1052
        %v1054 = vpop.f32.mrf.mxu0
        %v1055 = vadd.f32 %v1006, %v1054
        %v1056 = vpop.f32.mrf.mxu0
        %v1057 = vadd.f32 %v1006, %v1056
        %1058 = vdwg.mxu0
        %v1059 = vmax.f32 %v1051, 0.0
        %v1060 = vmax.f32 %v1053, 0.0
        %v1061 = vmax.f32 %v1055, 0.0
        %v1062 = vmax.f32 %v1057, 0.0
        %v1063 = vld [vmem:[#allocation3 + $0x80] sm:$0xf]
        %v1064 = vld [vmem:[#allocation3 + $0x84] sm:$0xf]
        %v1065 = vld [vmem:[#allocation3 + $0x88] sm:$0xf]
        %v1066 = vld [vmem:[#allocation3 + $0x8c] sm:$0xf]
        %v1067 = vpack.c.bf16 %v1061, %v1059
        %v1068 = vpack.c.bf16 %v1062, %v1060
        %1069 = vset.pattern.permute.xlu0 6
        %1070 = vperm.xlu0 %1069, %v285
        %v1071 = vpop.permute.xlu0 %1070
        %1073 = vset.pattern.permute.xlu0 6
        %1074 = vperm.xlu0 %1073, %v286
        %v1075 = vpop.permute.xlu0 %1074
        %1077 = vset.pattern.permute.xlu0 6
        %1078 = vperm.xlu0 %1077, %v287
        %v1079 = vpop.permute.xlu0 %1078
        %1081 = vset.pattern.permute.xlu0 6
        %1082 = vperm.xlu0 %1081, %v288
        %v1083 = vpop.permute.xlu0 %1082
        %v1089 = vunpack.c.l.b16 %v1063
        %v1090 = vunpack.c.l.b16 %v1064
        %v1091 = vunpack.c.l.b16 %v1065
        %v1092 = vunpack.c.l.b16 %v1066
        %v1093 = vpack.c.b16 %v1090, %v1089
        %v1094 = vpack.c.b16 %v1092, %v1091
        %v1096 = vsel %vm428, %v1093, 0
        %v1099 = vsel %vm428, %v1094, 0
        %1101 = vmatprep.subr.bf16.mxu0 0
        %1102 = vmatpush1.bf16.msra.mxu0 0
        %1103 = vmatprep.subr.bf16.mxu0 0
        %1104 = vmatpush1.bf16.msra.mxu0 0
        %1105 = vmatprep.subr.bf16.mxu0 0
        %1106 = vmatpush1.bf16.msra.mxu0 0
        %1107 = vmatprep.subr.bf16.mxu0 0
        %1108 = vmatpush1.bf16.msra.mxu0 0
        %1109 = vmatprep.subr.bf16.mxu0 0
        %1110 = vmatpush1.bf16.msra.mxu0 0
        %1111 = vmatprep.subr.bf16.mxu0 0
        %1112 = vmatpush1.bf16.msra.mxu0 0
        %1113 = vmatprep.subr.bf16.mxu0 0
        %1114 = vmatpush1.bf16.msra.mxu0 0
        %1115 = vmatprep.subr.bf16.mxu0 %v1068
        %1116 = vmatpush1.bf16.msra.mxu0 %v1067
        %1117 = vmatprep.subr.bf16.mxu0 0
        %1118 = vmatpush2.bf16.msra.mxu0 0
        %1119 = vmatprep.subr.bf16.mxu0 0
        %1120 = vmatpush2.bf16.msra.mxu0 0
        %1121 = vmatprep.subr.bf16.mxu0 0
        %1122 = vmatpush2.bf16.msra.mxu0 0
        %1123 = vmatprep.subr.bf16.mxu0 0
        %1124 = vmatpush2.bf16.msra.mxu0 0
        %1125 = vmatprep.subr.bf16.mxu0 0
        %1126 = vmatpush2.bf16.msra.mxu0 0
        %1127 = vmatprep.subr.bf16.mxu0 0
        %1128 = vmatpush2.bf16.msra.mxu0 0
        %1129 = vmatprep.subr.bf16.mxu0 0
        %1130 = vmatpush2.bf16.msra.mxu0 0
        %1131 = vmatprep.subr.bf16.mxu0 0
        %1132 = vmatpush2.bf16.msra.mxu0 0
        %1133 = vmatprep.mubr.bf16.mxu0 0
        %1134 = vmatmul.mubr.bf16.gmra.mxu0 %v1096
        %v1135 = vpop.f32.mrf.mxu0
        %v1136 = vadd.f32 %v1071, %v1135
        %v1137 = vpop.f32.mrf.mxu0
        %v1138 = vadd.f32 %v1071, %v1137
        %v1139 = vpop.f32.mrf.mxu0
        %v1140 = vadd.f32 %v1075, %v1139
        %v1141 = vpop.f32.mrf.mxu0
        %v1142 = vadd.f32 %v1075, %v1141
        %1143 = vmatprep.mubr.bf16.mxu0 0
        %1144 = vmatmul.mubr.bf16.gmra.mxu0 %v1099
        %v1145 = vpop.f32.mrf.mxu0
        %v1146 = vadd.f32 %v1079, %v1145
        %v1147 = vpop.f32.mrf.mxu0
        %v1148 = vadd.f32 %v1079, %v1147
        %v1149 = vpop.f32.mrf.mxu0
        %v1150 = vadd.f32 %v1083, %v1149
        %v1151 = vpop.f32.mrf.mxu0
        %v1152 = vadd.f32 %v1083, %v1151
        %1153 = vdwg.mxu0
        %v1154 = vmax.f32 %v1136, 0.0
        %v1155 = vmax.f32 %v1138, 0.0
        %v1156 = vmax.f32 %v1140, 0.0
        %v1157 = vmax.f32 %v1142, 0.0
        %v1158 = vmax.f32 %v1146, 0.0
        %v1159 = vmax.f32 %v1148, 0.0
        %v1160 = vmax.f32 %v1150, 0.0
        %v1161 = vmax.f32 %v1152, 0.0
        %v1162 = vld [vmem:[#allocation3 + $0x90] sm:$0xf]
        %v1163 = vld [vmem:[#allocation3 + $0x94] sm:$0xf]
        %v1164 = vld [vmem:[#allocation3 + $0x98] sm:$0xf]
        %v1165 = vld [vmem:[#allocation3 + $0x9c] sm:$0xf]
        %v1166 = vld [vmem:[#allocation3 + $0xa0] sm:$0xf]
        %v1167 = vld [vmem:[#allocation3 + $0xa4] sm:$0xf]
        %v1168 = vld [vmem:[#allocation3 + $0xa8] sm:$0xf]
        %v1169 = vld [vmem:[#allocation3 + $0xac] sm:$0xf]
        %v1170 = vpack.c.bf16 %v1156, %v1154
        %v1171 = vpack.c.bf16 %v1157, %v1155
        %v1172 = vpack.c.bf16 %v1160, %v1158
        %v1173 = vpack.c.bf16 %v1161, %v1159
        %1174 = vset.pattern.permute.xlu0 7
        %1175 = vperm.xlu0 %1174, %v285
        %v1176 = vpop.permute.xlu0 %1175
        %1178 = vset.pattern.permute.xlu0 7
        %1179 = vperm.xlu0 %1178, %v286
        %v1180 = vpop.permute.xlu0 %1179
        %1182 = vset.pattern.permute.xlu0 7
        %1183 = vperm.xlu0 %1182, %v287
        %v1184 = vpop.permute.xlu0 %1183
        %1186 = vset.pattern.permute.xlu0 7
        %1187 = vperm.xlu0 %1186, %v288
        %v1188 = vpop.permute.xlu0 %1187
        %1190 = vset.pattern.permute.xlu0 7
        %1191 = vperm.xlu0 %1190, %v289
        %v1192 = vpop.permute.xlu0 %1191
        %1194 = vset.pattern.permute.xlu0 7
        %1195 = vperm.xlu0 %1194, %v290
        %v1196 = vpop.permute.xlu0 %1195
        %1198 = vset.pattern.permute.xlu0 7
        %1199 = vperm.xlu0 %1198, %v291
        %v1200 = vpop.permute.xlu0 %1199
        %1202 = vset.pattern.permute.xlu0 7
        %1203 = vperm.xlu0 %1202, %v292
        %v1204 = vpop.permute.xlu0 %1203
        %v1214 = vunpack.c.l.b16 %v1162
        %v1215 = vunpack.c.l.b16 %v1163
        %v1216 = vunpack.c.l.b16 %v1164
        %v1217 = vunpack.c.l.b16 %v1165
        %v1218 = vunpack.c.l.b16 %v1166
        %v1219 = vunpack.c.l.b16 %v1167
        %v1220 = vunpack.c.l.b16 %v1168
        %v1221 = vunpack.c.l.b16 %v1169
        %v1222 = vpack.c.b16 %v1215, %v1214
        %v1223 = vpack.c.b16 %v1217, %v1216
        %v1224 = vpack.c.b16 %v1219, %v1218
        %v1225 = vpack.c.b16 %v1221, %v1220
        %v1227 = vsel %vm882, %v1222, 0
        %v1230 = vsel %vm882, %v1223, 0
        %v1233 = vsel %vm882, %v1224, 0
        %v1236 = vsel %vm882, %v1225, 0
        %1238 = vmatprep.subr.bf16.mxu0 0
        %1239 = vmatpush1.bf16.msra.mxu0 0
        %1240 = vmatprep.subr.bf16.mxu0 0
        %1241 = vmatpush1.bf16.msra.mxu0 0
        %1242 = vmatprep.subr.bf16.mxu0 0
        %1243 = vmatpush1.bf16.msra.mxu0 0
        %1244 = vmatprep.subr.bf16.mxu0 0
        %1245 = vmatpush1.bf16.msra.mxu0 0
        %1246 = vmatprep.subr.bf16.mxu0 0
        %1247 = vmatpush1.bf16.msra.mxu0 0
        %1248 = vmatprep.subr.bf16.mxu0 0
        %1249 = vmatpush1.bf16.msra.mxu0 0
        %1250 = vmatprep.subr.bf16.mxu0 %v1173
        %1251 = vmatpush1.bf16.msra.mxu0 %v1172
        %1252 = vmatprep.subr.bf16.mxu0 %v1171
        %1253 = vmatpush1.bf16.msra.mxu0 %v1170
        %1254 = vmatprep.subr.bf16.mxu0 0
        %1255 = vmatpush2.bf16.msra.mxu0 0
        %1256 = vmatprep.subr.bf16.mxu0 0
        %1257 = vmatpush2.bf16.msra.mxu0 0
        %1258 = vmatprep.subr.bf16.mxu0 0
        %1259 = vmatpush2.bf16.msra.mxu0 0
        %1260 = vmatprep.subr.bf16.mxu0 0
        %1261 = vmatpush2.bf16.msra.mxu0 0
        %1262 = vmatprep.subr.bf16.mxu0 0
        %1263 = vmatpush2.bf16.msra.mxu0 0
        %1264 = vmatprep.subr.bf16.mxu0 0
        %1265 = vmatpush2.bf16.msra.mxu0 0
        %1266 = vmatprep.subr.bf16.mxu0 0
        %1267 = vmatpush2.bf16.msra.mxu0 0
        %1268 = vmatprep.subr.bf16.mxu0 0
        %1269 = vmatpush2.bf16.msra.mxu0 0
        %1270 = vmatprep.mubr.bf16.mxu0 0
        %1271 = vmatmul.mubr.bf16.gmra.mxu0 %v1227
        %v1272 = vpop.f32.mrf.mxu0
        %v1273 = vadd.f32 %v1176, %v1272
        %v1274 = vpop.f32.mrf.mxu0
        %v1275 = vadd.f32 %v1176, %v1274
        %v1276 = vpop.f32.mrf.mxu0
        %v1277 = vadd.f32 %v1180, %v1276
        %v1278 = vpop.f32.mrf.mxu0
        %v1279 = vadd.f32 %v1180, %v1278
        %1280 = vmatprep.mubr.bf16.mxu0 0
        %1281 = vmatmul.mubr.bf16.gmra.mxu0 %v1230
        %v1282 = vpop.f32.mrf.mxu0
        %v1283 = vadd.f32 %v1184, %v1282
        %v1284 = vpop.f32.mrf.mxu0
        %v1285 = vadd.f32 %v1184, %v1284
        %v1286 = vpop.f32.mrf.mxu0
        %v1287 = vadd.f32 %v1188, %v1286
        %v1288 = vpop.f32.mrf.mxu0
        %v1289 = vadd.f32 %v1188, %v1288
        %1290 = vmatprep.mubr.bf16.mxu0 0
        %1291 = vmatmul.mubr.bf16.gmra.mxu0 %v1233
        %v1292 = vpop.f32.mrf.mxu0
        %v1293 = vadd.f32 %v1192, %v1292
        %v1294 = vpop.f32.mrf.mxu0
        %v1295 = vadd.f32 %v1192, %v1294
        %v1296 = vpop.f32.mrf.mxu0
        %v1297 = vadd.f32 %v1196, %v1296
        %v1298 = vpop.f32.mrf.mxu0
        %v1299 = vadd.f32 %v1196, %v1298
        %1300 = vmatprep.mubr.bf16.mxu0 0
        %1301 = vmatmul.mubr.bf16.gmra.mxu0 %v1236
        %v1302 = vpop.f32.mrf.mxu0
        %v1303 = vadd.f32 %v1200, %v1302
        %v1304 = vpop.f32.mrf.mxu0
        %v1305 = vadd.f32 %v1200, %v1304
        %v1306 = vpop.f32.mrf.mxu0
        %v1307 = vadd.f32 %v1204, %v1306
        %v1308 = vpop.f32.mrf.mxu0
        %v1309 = vadd.f32 %v1204, %v1308
        %1310 = vdwg.mxu0
        %v1311 = vmax.f32 %v1273, 0.0
        %v1312 = vmax.f32 %v1275, 0.0
        %v1313 = vmax.f32 %v1277, 0.0
        %v1314 = vmax.f32 %v1279, 0.0
        %v1315 = vmax.f32 %v1283, 0.0
        %v1316 = vmax.f32 %v1285, 0.0
        %v1317 = vmax.f32 %v1287, 0.0
        %v1318 = vmax.f32 %v1289, 0.0
        %v1319 = vmax.f32 %v1293, 0.0
        %v1320 = vmax.f32 %v1295, 0.0
        %v1321 = vmax.f32 %v1297, 0.0
        %v1322 = vmax.f32 %v1299, 0.0
        %v1323 = vmax.f32 %v1303, 0.0
        %v1324 = vmax.f32 %v1305, 0.0
        %v1325 = vmax.f32 %v1307, 0.0
        %v1326 = vmax.f32 %v1309, 0.0
        %v1327 = vld [vmem:[#allocation3 + $0xb0] sm:$0xf]
        %v1328 = vld [vmem:[#allocation3 + $0xb4] sm:$0xf]
        %v1329 = vld [vmem:[#allocation3 + $0xb8] sm:$0xf]
        %v1330 = vld [vmem:[#allocation3 + $0xbc] sm:$0xf]
        %v1331 = vld [vmem:[#allocation3 + $0xc0] sm:$0xf]
        %v1332 = vld [vmem:[#allocation3 + $0xc4] sm:$0xf]
        %v1333 = vld [vmem:[#allocation3 + $0xc8] sm:$0xf]
        %v1334 = vld [vmem:[#allocation3 + $0xcc] sm:$0xf]
        %v1335 = vld [vmem:[#allocation3 + $0xd0] sm:$0xf]
        %v1336 = vld [vmem:[#allocation3 + $0xd4] sm:$0xf]
        %v1337 = vld [vmem:[#allocation3 + $0xd8] sm:$0xf]
        %v1338 = vld [vmem:[#allocation3 + $0xdc] sm:$0xf]
        %v1339 = vld [vmem:[#allocation3 + $0xe0] sm:$0xf]
        %v1340 = vld [vmem:[#allocation3 + $0xe4] sm:$0xf]
        %v1341 = vpack.c.bf16 %v1313, %v1311
        %v1342 = vpack.c.bf16 %v1314, %v1312
        %v1343 = vpack.c.bf16 %v1317, %v1315
        %v1344 = vpack.c.bf16 %v1318, %v1316
        %v1345 = vpack.c.bf16 %v1321, %v1319
        %v1346 = vpack.c.bf16 %v1322, %v1320
        %v1347 = vpack.c.bf16 %v1325, %v1323
        %v1348 = vpack.c.bf16 %v1326, %v1324
        %1349 = vset.pattern.permute.xlu0 8
        %1350 = vperm.xlu0 %1349, %v285
        %v1351 = vpop.permute.xlu0 %1350
        %1353 = vset.pattern.permute.xlu0 8
        %1354 = vperm.xlu0 %1353, %v286
        %v1355 = vpop.permute.xlu0 %1354
        %1357 = vset.pattern.permute.xlu0 8
        %1358 = vperm.xlu0 %1357, %v287
        %v1359 = vpop.permute.xlu0 %1358
        %1361 = vset.pattern.permute.xlu0 8
        %1362 = vperm.xlu0 %1361, %v288
        %v1363 = vpop.permute.xlu0 %1362
        %1365 = vset.pattern.permute.xlu0 8
        %1366 = vperm.xlu0 %1365, %v289
        %v1367 = vpop.permute.xlu0 %1366
        %1369 = vset.pattern.permute.xlu0 8
        %1370 = vperm.xlu0 %1369, %v290
        %v1371 = vpop.permute.xlu0 %1370
        %1373 = vset.pattern.permute.xlu0 8
        %1374 = vperm.xlu0 %1373, %v291
        %v1375 = vpop.permute.xlu0 %1374
        %1377 = vset.pattern.permute.xlu0 8
        %1378 = vperm.xlu0 %1377, %v292
        %v1379 = vpop.permute.xlu0 %1378
        %1381 = vset.pattern.permute.xlu0 8
        %1382 = vperm.xlu0 %1381, %v293
        %v1383 = vpop.permute.xlu0 %1382
        %1385 = vset.pattern.permute.xlu0 8
        %1386 = vperm.xlu0 %1385, %v294
        %v1387 = vpop.permute.xlu0 %1386
        %1389 = vset.pattern.permute.xlu0 8
        %1390 = vperm.xlu0 %1389, %v295
        %v1391 = vpop.permute.xlu0 %1390
        %1393 = vset.pattern.permute.xlu0 8
        %1394 = vperm.xlu0 %1393, %v296
        %v1395 = vpop.permute.xlu0 %1394
        %1397 = vset.pattern.permute.xlu0 8
        %1398 = vperm.xlu0 %1397, %v297
        %v1399 = vpop.permute.xlu0 %1398
        %1401 = vset.pattern.permute.xlu0 8
        %1402 = vperm.xlu0 %1401, %v298
        %v1403 = vpop.permute.xlu0 %1402
        %v1419 = vunpack.c.l.b16 %v1327
        %v1420 = vunpack.c.l.b16 %v1328
        %v1421 = vunpack.c.l.b16 %v1329
        %v1422 = vunpack.c.l.b16 %v1330
        %v1423 = vunpack.c.l.b16 %v1331
        %v1424 = vunpack.c.l.b16 %v1332
        %v1425 = vunpack.c.l.b16 %v1333
        %v1426 = vunpack.c.l.b16 %v1334
        %v1427 = vunpack.c.l.b16 %v1335
        %v1428 = vunpack.c.l.b16 %v1336
        %v1429 = vunpack.c.l.b16 %v1337
        %v1430 = vunpack.c.l.b16 %v1338
        %v1431 = vunpack.c.l.b16 %v1339
        %v1432 = vunpack.c.l.b16 %v1340
        %v1433 = vpack.c.b16 %v1420, %v1419
        %v1434 = vpack.c.b16 %v1422, %v1421
        %v1435 = vpack.c.b16 %v1424, %v1423
        %v1436 = vpack.c.b16 %v1426, %v1425
        %v1437 = vpack.c.b16 %v1428, %v1427
        %v1438 = vpack.c.b16 %v1430, %v1429
        %v1439 = vpack.c.b16 %v1432, %v1431
        %v1441 = vsel %vm795, %v1433, 0
        %v1444 = vsel %vm795, %v1434, 0
        %v1447 = vsel %vm795, %v1435, 0
        %v1450 = vsel %vm795, %v1436, 0
        %v1453 = vsel %vm795, %v1437, 0
        %v1456 = vsel %vm795, %v1438, 0
        %v1459 = vsel %vm795, %v1439, 0
        %1461 = vmatprep.subr.bf16.mxu0 0
        %1462 = vmatpush1.bf16.msra.mxu0 0
        %1463 = vmatprep.subr.bf16.mxu0 0
        %1464 = vmatpush1.bf16.msra.mxu0 0
        %1465 = vmatprep.subr.bf16.mxu0 0
        %1466 = vmatpush1.bf16.msra.mxu0 0
        %1467 = vmatprep.subr.bf16.mxu0 0
        %1468 = vmatpush1.bf16.msra.mxu0 0
        %1469 = vmatprep.subr.bf16.mxu0 %v1348
        %1470 = vmatpush1.bf16.msra.mxu0 %v1347
        %1471 = vmatprep.subr.bf16.mxu0 %v1346
        %1472 = vmatpush1.bf16.msra.mxu0 %v1345
        %1473 = vmatprep.subr.bf16.mxu0 %v1344
        %1474 = vmatpush1.bf16.msra.mxu0 %v1343
        %1475 = vmatprep.subr.bf16.mxu0 %v1342
        %1476 = vmatpush1.bf16.msra.mxu0 %v1341
        %1477 = vmatprep.subr.bf16.mxu0 0
        %1478 = vmatpush2.bf16.msra.mxu0 0
        %1479 = vmatprep.subr.bf16.mxu0 0
        %1480 = vmatpush2.bf16.msra.mxu0 0
        %1481 = vmatprep.subr.bf16.mxu0 0
        %1482 = vmatpush2.bf16.msra.mxu0 0
        %1483 = vmatprep.subr.bf16.mxu0 0
        %1484 = vmatpush2.bf16.msra.mxu0 0
        %1485 = vmatprep.subr.bf16.mxu0 0
        %1486 = vmatpush2.bf16.msra.mxu0 0
        %1487 = vmatprep.subr.bf16.mxu0 0
        %1488 = vmatpush2.bf16.msra.mxu0 0
        %1489 = vmatprep.subr.bf16.mxu0 0
        %1490 = vmatpush2.bf16.msra.mxu0 0
        %1491 = vmatprep.subr.bf16.mxu0 0
        %1492 = vmatpush2.bf16.msra.mxu0 0
        %1493 = vmatprep.mubr.bf16.mxu0 0
        %1494 = vmatmul.mubr.bf16.gmra.mxu0 %v1441
        %v1495 = vpop.f32.mrf.mxu0
        %v1496 = vadd.f32 %v1351, %v1495
        %v1497 = vpop.f32.mrf.mxu0
        %v1498 = vadd.f32 %v1351, %v1497
        %v1499 = vpop.f32.mrf.mxu0
        %v1500 = vadd.f32 %v1355, %v1499
        %v1501 = vpop.f32.mrf.mxu0
        %v1502 = vadd.f32 %v1355, %v1501
        %1503 = vmatprep.mubr.bf16.mxu0 0
        %1504 = vmatmul.mubr.bf16.gmra.mxu0 %v1444
        %v1505 = vpop.f32.mrf.mxu0
        %v1506 = vadd.f32 %v1359, %v1505
        %v1507 = vpop.f32.mrf.mxu0
        %v1508 = vadd.f32 %v1359, %v1507
        %v1509 = vpop.f32.mrf.mxu0
        %v1510 = vadd.f32 %v1363, %v1509
        %v1511 = vpop.f32.mrf.mxu0
        %v1512 = vadd.f32 %v1363, %v1511
        %1513 = vmatprep.mubr.bf16.mxu0 0
        %1514 = vmatmul.mubr.bf16.gmra.mxu0 %v1447
        %v1515 = vpop.f32.mrf.mxu0
        %v1516 = vadd.f32 %v1367, %v1515
        %v1517 = vpop.f32.mrf.mxu0
        %v1518 = vadd.f32 %v1367, %v1517
        %v1519 = vpop.f32.mrf.mxu0
        %v1520 = vadd.f32 %v1371, %v1519
        %v1521 = vpop.f32.mrf.mxu0
        %v1522 = vadd.f32 %v1371, %v1521
        %1523 = vmatprep.mubr.bf16.mxu0 0
        %1524 = vmatmul.mubr.bf16.gmra.mxu0 %v1450
        %v1525 = vpop.f32.mrf.mxu0
        %v1526 = vadd.f32 %v1375, %v1525
        %v1527 = vpop.f32.mrf.mxu0
        %v1528 = vadd.f32 %v1375, %v1527
        %v1529 = vpop.f32.mrf.mxu0
        %v1530 = vadd.f32 %v1379, %v1529
        %v1531 = vpop.f32.mrf.mxu0
        %v1532 = vadd.f32 %v1379, %v1531
        %1533 = vmatprep.mubr.bf16.mxu0 0
        %1534 = vmatmul.mubr.bf16.gmra.mxu0 %v1453
        %v1535 = vpop.f32.mrf.mxu0
        %v1536 = vadd.f32 %v1383, %v1535
        %v1537 = vpop.f32.mrf.mxu0
        %v1538 = vadd.f32 %v1383, %v1537
        %v1539 = vpop.f32.mrf.mxu0
        %v1540 = vadd.f32 %v1387, %v1539
        %v1541 = vpop.f32.mrf.mxu0
        %v1542 = vadd.f32 %v1387, %v1541
        %1543 = vmatprep.mubr.bf16.mxu0 0
        %1544 = vmatmul.mubr.bf16.gmra.mxu0 %v1456
        %v1545 = vpop.f32.mrf.mxu0
        %v1546 = vadd.f32 %v1391, %v1545
        %v1547 = vpop.f32.mrf.mxu0
        %v1548 = vadd.f32 %v1391, %v1547
        %v1549 = vpop.f32.mrf.mxu0
        %v1550 = vadd.f32 %v1395, %v1549
        %v1551 = vpop.f32.mrf.mxu0
        %v1552 = vadd.f32 %v1395, %v1551
        %1553 = vmatprep.mubr.bf16.mxu0 0
        %1554 = vmatmul.mubr.bf16.gmra.mxu0 %v1459
        %v1555 = vpop.f32.mrf.mxu0
        %v1556 = vadd.f32 %v1399, %v1555
        %v1557 = vpop.f32.mrf.mxu0
        %v1558 = vadd.f32 %v1399, %v1557
        %v1559 = vpop.f32.mrf.mxu0
        %v1560 = vadd.f32 %v1403, %v1559
        %v1561 = vpop.f32.mrf.mxu0
        %v1562 = vadd.f32 %v1403, %v1561
        %1563 = vdwg.mxu0
        %v1564 = vmax.f32 %v1496, 0.0
        %v1565 = vmax.f32 %v1498, 0.0
        %v1566 = vmax.f32 %v1500, 0.0
        %v1567 = vmax.f32 %v1502, 0.0
        %v1568 = vmax.f32 %v1506, 0.0
        %v1569 = vmax.f32 %v1508, 0.0
        %v1570 = vmax.f32 %v1510, 0.0
        %v1571 = vmax.f32 %v1512, 0.0
        %v1572 = vmax.f32 %v1516, 0.0
        %v1573 = vmax.f32 %v1518, 0.0
        %v1574 = vmax.f32 %v1520, 0.0
        %v1575 = vmax.f32 %v1522, 0.0
        %v1576 = vmax.f32 %v1526, 0.0
        %v1577 = vmax.f32 %v1528, 0.0
        %v1578 = vmax.f32 %v1530, 0.0
        %v1579 = vmax.f32 %v1532, 0.0
        %v1580 = vmax.f32 %v1536, 0.0
        %v1581 = vmax.f32 %v1538, 0.0
        %v1582 = vmax.f32 %v1540, 0.0
        %v1583 = vmax.f32 %v1542, 0.0
        %v1584 = vmax.f32 %v1546, 0.0
        %v1585 = vmax.f32 %v1548, 0.0
        %v1586 = vmax.f32 %v1550, 0.0
        %v1587 = vmax.f32 %v1552, 0.0
        %v1588 = vmax.f32 %v1556, 0.0
        %v1589 = vmax.f32 %v1558, 0.0
        %v1590 = vmax.f32 %v1560, 0.0
        %v1591 = vmax.f32 %v1562, 0.0
        %v1592 = vld [vmem:[#allocation3 + $0xe8] sm:$0xf]
        %v1593 = vld [vmem:[#allocation3 + $0xec] sm:$0xf]
        %v1594 = vpack.c.bf16 %v1566, %v1564
        %v1595 = vpack.c.bf16 %v1567, %v1565
        %v1596 = vpack.c.bf16 %v1570, %v1568
        %v1597 = vpack.c.bf16 %v1571, %v1569
        %v1598 = vpack.c.bf16 %v1574, %v1572
        %v1599 = vpack.c.bf16 %v1575, %v1573
        %v1600 = vpack.c.bf16 %v1578, %v1576
        %v1601 = vpack.c.bf16 %v1579, %v1577
        %v1602 = vpack.c.bf16 %v1582, %v1580
        %v1603 = vpack.c.bf16 %v1583, %v1581
        %v1604 = vpack.c.bf16 %v1586, %v1584
        %v1605 = vpack.c.bf16 %v1587, %v1585
        %v1606 = vpack.c.bf16 %v1590, %v1588
        %v1607 = vpack.c.bf16 %v1591, %v1589
        %1608 = vset.pattern.permute.xlu0 9
        %1609 = vperm.xlu0 %1608, %v285
        %v1610 = vpop.permute.xlu0 %1609
        %1612 = vset.pattern.permute.xlu0 9
        %1613 = vperm.xlu0 %1612, %v286
        %v1614 = vpop.permute.xlu0 %1613
        %v1618 = vunpack.c.l.b16 %v1592
        %v1619 = vunpack.c.l.b16 %v1593
        %v1620 = vpack.c.b16 %v1619, %v1618
        %v1622 = vsel %vm655, %v1620, 0
        %1624 = vmatprep.subr.bf16.mxu0 0
        %1625 = vmatpush1.bf16.msra.mxu0 0
        %1626 = vmatprep.subr.bf16.mxu0 %v1607
        %1627 = vmatpush1.bf16.msra.mxu0 %v1606
        %1628 = vmatprep.subr.bf16.mxu0 %v1605
        %1629 = vmatpush1.bf16.msra.mxu0 %v1604
        %1630 = vmatprep.subr.bf16.mxu0 %v1603
        %1631 = vmatpush1.bf16.msra.mxu0 %v1602
        %1632 = vmatprep.subr.bf16.mxu0 %v1601
        %1633 = vmatpush1.bf16.msra.mxu0 %v1600
        %1634 = vmatprep.subr.bf16.mxu0 %v1599
        %1635 = vmatpush1.bf16.msra.mxu0 %v1598
        %1636 = vmatprep.subr.bf16.mxu0 %v1597
        %1637 = vmatpush1.bf16.msra.mxu0 %v1596
        %1638 = vmatprep.subr.bf16.mxu0 %v1595
        %1639 = vmatpush1.bf16.msra.mxu0 %v1594
        %1640 = vmatprep.subr.bf16.mxu0 0
        %1641 = vmatpush2.bf16.msra.mxu0 0
        %1642 = vmatprep.subr.bf16.mxu0 0
        %1643 = vmatpush2.bf16.msra.mxu0 0
        %1644 = vmatprep.subr.bf16.mxu0 0
        %1645 = vmatpush2.bf16.msra.mxu0 0
        %1646 = vmatprep.subr.bf16.mxu0 0
        %1647 = vmatpush2.bf16.msra.mxu0 0
        %1648 = vmatprep.subr.bf16.mxu0 0
        %1649 = vmatpush2.bf16.msra.mxu0 0
        %1650 = vmatprep.subr.bf16.mxu0 0
        %1651 = vmatpush2.bf16.msra.mxu0 0
        %1652 = vmatprep.subr.bf16.mxu0 0
        %1653 = vmatpush2.bf16.msra.mxu0 0
        %1654 = vmatprep.subr.bf16.mxu0 0
        %1655 = vmatpush2.bf16.msra.mxu0 0
        %1656 = vmatprep.mubr.bf16.mxu0 0
        %1657 = vmatmul.mubr.bf16.gmra.mxu0 %v1622
        %v1658 = vpop.f32.mrf.mxu0
        %v1659 = vadd.f32 %v1610, %v1658
        %v1660 = vpop.f32.mrf.mxu0
        %v1661 = vadd.f32 %v1610, %v1660
        %v1662 = vpop.f32.mrf.mxu0
        %v1663 = vadd.f32 %v1614, %v1662
        %v1664 = vpop.f32.mrf.mxu0
        %v1665 = vadd.f32 %v1614, %v1664
        %1666 = vdwg.mxu0
        %v1667 = vxor.u32 %v1659, 2147483648
        %v1668 = vxor.u32 %v1661, 2147483648
        %v1669 = vxor.u32 %v1663, 2147483648
        %v1670 = vxor.u32 %v1665, 2147483648
        %v1671 = vmul.f32 %v1667, 1.442695
        %v1672 = vpow.pop %v1671
        %v1673 = vmul.f32 %v1668, 1.442695
        %v1674 = vpow.pop %v1673
        %v1675 = vmul.f32 %v1669, 1.442695
        %v1676 = vpow.pop %v1675
        %v1677 = vmul.f32 %v1670, 1.442695
        %v1678 = vpow.pop %v1677
        %v1679 = vadd.f32 %v1672, 1.0
        %v1680 = vadd.f32 %v1674, 1.0
        %v1681 = vadd.f32 %v1676, 1.0
        %v1682 = vadd.f32 %v1678, 1.0
        %v1683 = vrcp.pop %v1679
        %v1684 = vmul.f32 1.0, %v1683
        %v1685 = vrcp.pop %v1680
        %v1686 = vmul.f32 1.0, %v1685
        %v1687 = vrcp.pop %v1681
        %v1688 = vmul.f32 1.0, %v1687
        %v1689 = vrcp.pop %v1682
        %v1690 = vmul.f32 1.0, %v1689
        %1691 = vst [vmem:[%s266] sm:$0xff] %v1684
        %1692 = vst [vmem:[%s266 + $0x8] sm:$0xff] %v1686
        %1693 = vst [vmem:[%s266 + $0x10] sm:$0xff] %v1688
        %1694 = vst [vmem:[%s266 + $0x18] sm:$0xff] %v1690
        %v1695 = vlaneseq
        %v1696 = vshrl.u32 %v1695, 7
        %v1697 = vsub.s32 0, %v1696
        %v1698 = vrot.slane %v988, %v1697
        %v1699 = vlaneseq
        %v1700 = vshrl.u32 %v1699, 7
        %v1701 = vsub.s32 0, %v1700
        %v1702 = vrot.slane %v990, %v1701
        %1703 = vst [vmem:[%s280] sm:$0xff] %v1698
        %1704 = vst [vmem:[%s280 + $0x8] sm:$0xff] %v1702
        %s1705 = sand.u32 %s97, 1
        %s1706 = scalar_lea.sflag [#allocation5], %s1705
        %s1707 = sand.u32 %s97, 1
        %s1708 = smul.addr %s1707, 32
        %s1709 = scalar_lea.vmem [#allocation8], %s1708
        %s1710 = smul.u32 2, %s21
        %p1711 = scmp.lt.s32.totalorder %s1710, 3
        %s1712 = scalar_select %p1711, %s1710, 3
        %s1713 = smul.addr %s1712, 8
        %s1714 = scalar_lea.vmem %s4, %s1713
        // Predicated region
        $region79: #{f_ae_forward.1} parent=65 // pred_check
          %p1715 = pneg %p107
        $region80: #{f_ae_forward.1} parent=65 // pred_check_branch
          %1717 = sbr.rel (%p1715) target = $region82
        $region81: #{f_ae_forward.1} parent=65 // pred_region
          %s1718 = smul.u32 2, %s21
          %s1720 = ssub.s32 512, 512
          %1721 = vsyncadd %s1706, %s1720
          %s1722 = smul.addr %s1718, 128
          %s1723 = scalar_lea.hbm %s3, %s1722
          %s1724 = sshll.u32 %s1709, 4
          %s1725 = int_to_ptr.vmem [resolvable:$true] %s1724
          %1730 = dma.vmem_to_hbm [thread:$0]  %s1725, 512, %s1723, %s1706, 256, 512, 16
        $region82: #{f_ae_forward.1} parent=65 // pred_fallthru
          _
        // Predicated region
        $region83: #{f_ae_forward.1} parent=65 // pred_check
          %p1731 = pneg %p133
        $region84: #{f_ae_forward.1} parent=65 // pred_check_branch
          %1733 = sbr.rel (%p1731) target = $region86
        $region85: #{f_ae_forward.1} parent=65 // pred_region
          %s1734 = smul.u32 2, %s21
        $region86: #{f_ae_forward.1} parent=65 // pred_fallthru
          _
      $region66: #{f_ae_forward.1} parent=5 // pred_fallthru
        _
      %p1735 = scmp.le.s32.totalorder 2, %s16
      // Predicated region
      $region87: #{f_ae_forward.1} parent=5 // pred_check
        %p1736 = pneg %p1735
      $region88: #{f_ae_forward.1} parent=5 // pred_check_branch
        %1738 = sbr.rel (%p1736) target = $region90
      $region89: #{f_ae_forward.1} parent=5 // pred_region
        %s1739 = ssub.s32 %s16, 2
        // Predicated region
        $region91: #{f_ae_forward.1} parent=89 // pred_check
          %p1740 = pneg %p113
        $region92: #{f_ae_forward.1} parent=89 // pred_check_branch
          %1742 = sbr.rel (%p1740) target = $region94
        $region93: #{f_ae_forward.1} parent=89 // pred_region
          %s1743 = sand.u32 %s98, 1
          %s1744 = scalar_lea.sflag [#allocation5], %s1743
          %s1745 = sand.u32 %s98, 1
          %s1746 = smul.addr %s1745, 32
          %s1747 = scalar_lea.vmem [#allocation8], %s1746
          %1748 = dma.done %s1744, 512
        $region94: #{f_ae_forward.1} parent=89 // pred_fallthru
          _
        // Predicated region
        $region95: #{f_ae_forward.1} parent=89 // pred_check
          %p1749 = pneg %p139
        $region96: #{f_ae_forward.1} parent=89 // pred_check_branch
          %1751 = sbr.rel (%p1749) target = $region98
        $region97: #{f_ae_forward.1} parent=89 // pred_region
          %s1752 = smul.u32 2, %s22
          %p1753 = scmp.lt.s32.totalorder %s1752, 3
          %s1754 = scalar_select %p1753, %s1752, 3
          %s1755 = smul.addr %s1754, 8
          %s1756 = scalar_lea.vmem %s4, %s1755
        $region98: #{f_ae_forward.1} parent=89 // pred_fallthru
          _
      $region90: #{f_ae_forward.1} parent=5 // pred_fallthru
        _
    $region6: #{f_ae_forward.1} parent=1 // loop_footer
      %s20 = sadd.s32 1, %s16
    $region7: #{f_ae_forward.1} parent=1 // loop_footer_branch
      %15 = sbr.rel target = $region3
    $region8: #{f_ae_forward.1} parent=1 // loop_exit
      _
    %1757 = vsyncpa [#allocation4], 1
    %s1758 = scalar_lea.sflag [#allocation4], 1
    %1759 = vsyncpa %s1758, 1
    %1760 = vsyncpa [#allocation7], 1
    %1761 = vsyncpa [#allocation5], 1
    %s1762 = scalar_lea.sflag [#allocation5], 1
    %1763 = vsyncpa %s1762, 1

</llo_original>
